<compile_context>
chip_gen: v6e
topology: v6e:2x2x1
jax: 0.10.0
libtpu: 0.0.40
codegen_flags: <defaults>
</compile_context>

<pallas_src>
import jax
import jax.numpy as jnp
from jax.experimental import pallas as pl
from jax.experimental.pallas import tpu as pltpu


N_LAYERS = 12  # fc1, fc2, 3 x (rb.fc1, rb.fc2), fc3, fc4, fc5, fc6


def _round_up(v, m):
    return ((v + m - 1) // m) * m


def linna_kernel(x_ref, w_ref, b_ref, o_ref):
    """Fused LINNA forward on one (tm, P) batch tile.

    x_ref: (tm, P) f32          -- input, feature-padded to P lanes
    w_ref: (12, P, P) bf16      -- stacked, pre-transposed (in, out) weights
    b_ref: (12, 1, P) f32       -- stacked biases
    o_ref: (tm, P) f32
    """

    def linear(h, idx, relu=True):
        y = jnp.dot(h.astype(jnp.bfloat16), w_ref[idx],
                    preferred_element_type=jnp.float32)
        y = y + b_ref[idx]
        return jnp.maximum(y, 0.0) if relu else y

    h = x_ref[...].astype(jnp.float32)
    h = linear(h, 0)                            # fc1 + relu
    h = linear(h, 1)                            # fc2 + relu
    for rb in range(3):                         # 3 ResBlocks
        residual = h
        t = linear(h, 2 + 2 * rb)               # rb.fc1 + relu
        t = linear(t, 3 + 2 * rb, relu=False)   # rb.fc2
        h = jnp.maximum(t + residual, 0.0)      # += residual; relu
    h = linear(h, 8)                            # fc3 + relu
    h = linear(h, 9)                            # fc4 + relu
    h = linear(h, 10)                           # fc5 + relu
    h = linear(h, 11, relu=False)               # fc6 (no relu)
    o_ref[...] = h.astype(o_ref.dtype)


def linna_forward(x, weights, biases, *, tm=128):
    """x: (B, in_size) f32.  weights[i]: (d_in, d_out) f32 (i.e. PyTorch W.T).
    biases[i]: (d_out,) f32.  Returns (B, out_size) f32."""
    assert len(weights) == N_LAYERS and len(biases) == N_LAYERS
    B, in_size = x.shape
    out_size = weights[-1].shape[1]

    # Common lane-dense feature width (multiple of 128).
    max_dim = max(max(max(w.shape) for w in weights), in_size)
    P = _round_up(max_dim, 128)

    # Batch tiling: sublane-aligned; tm rows per grid step (MXU-sized cap).
    Bp = _round_up(B, 8)
    tm = min(tm, Bp)
    Bp = _round_up(Bp, tm)
    grid = (Bp // tm,)

    # Zero-pad + stack parameters. Zero pad rows/cols/biases keep the padded
    # lanes exactly zero through every layer, including the residual adds.
    w_stack = jnp.stack(
        [jnp.pad(w, ((0, P - w.shape[0]), (0, P - w.shape[1]))) for w in weights]
    ).astype(jnp.bfloat16)                                      # (12, P, P)
    b_stack = jnp.stack(
        [jnp.pad(b, (0, P - b.shape[0]))[None, :] for b in biases]
    ).astype(jnp.float32)                                       # (12, 1, P)
    x_pad = jnp.pad(x, ((0, Bp - B), (0, P - in_size))).astype(jnp.float32)

    out = pl.pallas_call(
        linna_kernel,
        out_shape=jax.ShapeDtypeStruct((Bp, P), jnp.float32),
        grid_spec=pltpu.PrefetchScalarGridSpec(
            num_scalar_prefetch=0,
            grid=grid,
            in_specs=[
                pl.BlockSpec((tm, P), lambda i: (i, 0)),              # x tile
                pl.BlockSpec((N_LAYERS, P, P), lambda i: (0, 0, 0)),  # weights
                pl.BlockSpec((N_LAYERS, 1, P), lambda i: (0, 0, 0)),  # biases
            ],
            out_specs=pl.BlockSpec((tm, P), lambda i: (i, 0)),
        ),
        compiler_params=pltpu.CompilerParams(
            dimension_semantics=("parallel",),
        ),
    )(x_pad, w_stack, b_stack)

    return out[:B, :out_size]


def linna_reference(x, weights, biases, matmul_dtype=jnp.bfloat16):
    """Pure-JAX reference with the same bf16-in / f32-accumulate math."""

    def lin(h, W, b, relu=True):
        y = jnp.dot(h.astype(matmul_dtype), W.astype(matmul_dtype),
                    preferred_element_type=jnp.float32) + b
        return jnp.maximum(y, 0.0) if relu else y

    h = lin(x, weights[0], biases[0])
    h = lin(h, weights[1], biases[1])
    for rb in range(3):
        r = h
        t = lin(h, weights[2 + 2 * rb], biases[2 + 2 * rb])
        t = lin(t, weights[3 + 2 * rb], biases[3 + 2 * rb], relu=False)
        h = jnp.maximum(t + r, 0.0)
    h = lin(h, weights[8], biases[8])
    h = lin(h, weights[9], biases[9])
    h = lin(h, weights[10], biases[10])
    return lin(h, weights[11], biases[11], relu=False)


if __name__ == "__main__":
    in_size, hidden_size, out_size = 16, 32, 8
    batch = 8

    layer_dims = [
        (in_size, in_size * 2),                 # fc1
        (in_size * 2, hidden_size),             # fc2
    ]
    for _ in range(3):                          # 3 ResBlocks
        layer_dims += [(hidden_size, hidden_size), (hidden_size, hidden_size)]
    layer_dims += [
        (hidden_size, hidden_size // 8),        # fc3
        (hidden_size // 8, hidden_size // 2),   # fc4
        (hidden_size // 2, out_size),           # fc5
        (out_size, out_size),                   # fc6
    ]

    key = jax.random.PRNGKey(0)
    weights, biases = [], []
    for d_in, d_out in layer_dims:
        key, kw, kb = jax.random.split(key, 3)
        bound = 1.0 / jnp.sqrt(jnp.float32(d_in))   # nn.Linear default init
        # Stored (in, out) == PyTorch W.T, so the kernel computes x @ W.T + b.
        weights.append(
            jax.random.uniform(kw, (d_in, d_out), jnp.float32, -bound, bound))
        biases.append(
            jax.random.uniform(kb, (d_out,), jnp.float32, -bound, bound))

    key, kx = jax.random.split(key)
    x = jax.random.normal(kx, (batch, in_size), jnp.float32)

    out = linna_forward(x, weights, biases)
    out = jax.block_until_ready(out)

    ref = linna_reference(x, weights, biases)
    assert out.shape == (batch, out_size)
    assert bool(jnp.all(jnp.isfinite(out)))
    assert jnp.allclose(out, ref, atol=1e-4, rtol=1e-3), float(
        jnp.max(jnp.abs(out - ref)))

    print("KERNEL_OK")
</pallas_src>

<mosaic_0001>
module attributes {stable_mosaic.version = 11 : i64} {
  func.func @linna_kernel(%arg0: i32, %arg1: memref<8x128xf32, #tpu.memory_space<vmem>>, %arg2: memref<12x128x128xbf16, #tpu.memory_space<vmem>>, %arg3: memref<12x1x128xf32, #tpu.memory_space<vmem>>, %arg4: memref<8x128xf32, #tpu.memory_space<vmem>>) attributes {dimension_semantics = [#tpu.dimension_semantics<parallel>], iteration_bounds = array<i64: 1>, scalar_prefetch = 0 : i64, scratch_operands = 0 : i64, tpu.core_type = #tpu.core_type<tc>, window_params = [{transform_indices = @transform_0, window_bounds = array<i64: 8, 128>}, {pipeline_mode = #tpu.pipeline_mode<synchronous>, transform_indices = @transform_1, window_bounds = array<i64: 12, 128, 128>}, {pipeline_mode = #tpu.pipeline_mode<synchronous>, transform_indices = @transform_2, window_bounds = array<i64: 12, 1, 128>}, {transform_indices = @transform_3, window_bounds = array<i64: 8, 128>}]} {
    %c0 = arith.constant 0 : index
    %c0_0 = arith.constant 0 : index
    %0 = vector.load %arg1[%c0, %c0_0] : memref<8x128xf32, #tpu.memory_space<vmem>>, vector<8x128xf32>
    %1 = arith.truncf %0 : vector<8x128xf32> to vector<8x128xbf16>
    %c0_1 = arith.constant 0 : index
    %c0_2 = arith.constant 0 : index
    %c0_3 = arith.constant 0 : index
    %2 = vector.load %arg2[%c0_1, %c0_2, %c0_3] : memref<12x128x128xbf16, #tpu.memory_space<vmem>>, vector<1x128x128xbf16>
    %3 = vector.shape_cast %2 : vector<1x128x128xbf16> to vector<128x128xbf16>
    %cst = arith.constant dense<0.000000e+00> : vector<8x128xf32>
    %4 = tpu.matmul %1, %3, %cst {dimension_numbers = #tpu.dot_dimension_numbers<[1], [0], [0], [1], [0, 0, 1, 1], [], []>} : vector<8x128xbf16>, vector<128x128xbf16>, vector<8x128xf32> -> vector<8x128xf32>
    %c0_4 = arith.constant 0 : index
    %c0_5 = arith.constant 0 : index
    %c0_6 = arith.constant 0 : index
    %5 = vector.load %arg3[%c0_4, %c0_5, %c0_6] : memref<12x1x128xf32, #tpu.memory_space<vmem>>, vector<1x1x128xf32>
    %6 = vector.shape_cast %5 : vector<1x1x128xf32> to vector<1x128xf32>
    %7 = vector.broadcast %6 : vector<1x128xf32> to vector<8x128xf32>
    %8 = arith.addf %4, %7 : vector<8x128xf32>
    %cst_7 = arith.constant 0.000000e+00 : f32
    %9 = vector.broadcast %cst_7 : f32 to vector<8x128xf32>
    %10 = arith.maximumf %8, %9 : vector<8x128xf32>
    %11 = arith.truncf %10 : vector<8x128xf32> to vector<8x128xbf16>
    %c1 = arith.constant 1 : index
    %c0_8 = arith.constant 0 : index
    %c0_9 = arith.constant 0 : index
    %12 = vector.load %arg2[%c1, %c0_8, %c0_9] : memref<12x128x128xbf16, #tpu.memory_space<vmem>>, vector<1x128x128xbf16>
    %13 = vector.shape_cast %12 : vector<1x128x128xbf16> to vector<128x128xbf16>
    %cst_10 = arith.constant dense<0.000000e+00> : vector<8x128xf32>
    %14 = tpu.matmul %11, %13, %cst_10 {dimension_numbers = #tpu.dot_dimension_numbers<[1], [0], [0], [1], [0, 0, 1, 1], [], []>} : vector<8x128xbf16>, vector<128x128xbf16>, vector<8x128xf32> -> vector<8x128xf32>
    %c1_11 = arith.constant 1 : index
    %c0_12 = arith.constant 0 : index
    %c0_13 = arith.constant 0 : index
    %15 = vector.load %arg3[%c1_11, %c0_12, %c0_13] : memref<12x1x128xf32, #tpu.memory_space<vmem>>, vector<1x1x128xf32>
    %16 = vector.shape_cast %15 : vector<1x1x128xf32> to vector<1x128xf32>
    %17 = vector.broadcast %16 : vector<1x128xf32> to vector<8x128xf32>
    %18 = arith.addf %14, %17 : vector<8x128xf32>
    %cst_14 = arith.constant 0.000000e+00 : f32
    %19 = vector.broadcast %cst_14 : f32 to vector<8x128xf32>
    %20 = arith.maximumf %18, %19 : vector<8x128xf32>
    %21 = arith.truncf %20 : vector<8x128xf32> to vector<8x128xbf16>
    %c2 = arith.constant 2 : index
    %c0_15 = arith.constant 0 : index
    %c0_16 = arith.constant 0 : index
    %22 = vector.load %arg2[%c2, %c0_15, %c0_16] : memref<12x128x128xbf16, #tpu.memory_space<vmem>>, vector<1x128x128xbf16>
    %23 = vector.shape_cast %22 : vector<1x128x128xbf16> to vector<128x128xbf16>
    %cst_17 = arith.constant dense<0.000000e+00> : vector<8x128xf32>
    %24 = tpu.matmul %21, %23, %cst_17 {dimension_numbers = #tpu.dot_dimension_numbers<[1], [0], [0], [1], [0, 0, 1, 1], [], []>} : vector<8x128xbf16>, vector<128x128xbf16>, vector<8x128xf32> -> vector<8x128xf32>
    %c2_18 = arith.constant 2 : index
    %c0_19 = arith.constant 0 : index
    %c0_20 = arith.constant 0 : index
    %25 = vector.load %arg3[%c2_18, %c0_19, %c0_20] : memref<12x1x128xf32, #tpu.memory_space<vmem>>, vector<1x1x128xf32>
    %26 = vector.shape_cast %25 : vector<1x1x128xf32> to vector<1x128xf32>
    %27 = vector.broadcast %26 : vector<1x128xf32> to vector<8x128xf32>
    %28 = arith.addf %24, %27 : vector<8x128xf32>
    %cst_21 = arith.constant 0.000000e+00 : f32
    %29 = vector.broadcast %cst_21 : f32 to vector<8x128xf32>
    %30 = arith.maximumf %28, %29 : vector<8x128xf32>
    %31 = arith.truncf %30 : vector<8x128xf32> to vector<8x128xbf16>
    %c3 = arith.constant 3 : index
    %c0_22 = arith.constant 0 : index
    %c0_23 = arith.constant 0 : index
    %32 = vector.load %arg2[%c3, %c0_22, %c0_23] : memref<12x128x128xbf16, #tpu.memory_space<vmem>>, vector<1x128x128xbf16>
    %33 = vector.shape_cast %32 : vector<1x128x128xbf16> to vector<128x128xbf16>
    %cst_24 = arith.constant dense<0.000000e+00> : vector<8x128xf32>
    %34 = tpu.matmul %31, %33, %cst_24 {dimension_numbers = #tpu.dot_dimension_numbers<[1], [0], [0], [1], [0, 0, 1, 1], [], []>} : vector<8x128xbf16>, vector<128x128xbf16>, vector<8x128xf32> -> vector<8x128xf32>
    %c3_25 = arith.constant 3 : index
    %c0_26 = arith.constant 0 : index
    %c0_27 = arith.constant 0 : index
    %35 = vector.load %arg3[%c3_25, %c0_26, %c0_27] : memref<12x1x128xf32, #tpu.memory_space<vmem>>, vector<1x1x128xf32>
    %36 = vector.shape_cast %35 : vector<1x1x128xf32> to vector<1x128xf32>
    %37 = vector.broadcast %36 : vector<1x128xf32> to vector<8x128xf32>
    %38 = arith.addf %34, %37 : vector<8x128xf32>
    %39 = arith.addf %38, %20 : vector<8x128xf32>
    %cst_28 = arith.constant 0.000000e+00 : f32
    %40 = vector.broadcast %cst_28 : f32 to vector<8x128xf32>
    %41 = arith.maximumf %39, %40 : vector<8x128xf32>
    %42 = arith.truncf %41 : vector<8x128xf32> to vector<8x128xbf16>
    %c4 = arith.constant 4 : index
    %c0_29 = arith.constant 0 : index
    %c0_30 = arith.constant 0 : index
    %43 = vector.load %arg2[%c4, %c0_29, %c0_30] : memref<12x128x128xbf16, #tpu.memory_space<vmem>>, vector<1x128x128xbf16>
    %44 = vector.shape_cast %43 : vector<1x128x128xbf16> to vector<128x128xbf16>
    %cst_31 = arith.constant dense<0.000000e+00> : vector<8x128xf32>
    %45 = tpu.matmul %42, %44, %cst_31 {dimension_numbers = #tpu.dot_dimension_numbers<[1], [0], [0], [1], [0, 0, 1, 1], [], []>} : vector<8x128xbf16>, vector<128x128xbf16>, vector<8x128xf32> -> vector<8x128xf32>
    %c4_32 = arith.constant 4 : index
    %c0_33 = arith.constant 0 : index
    %c0_34 = arith.constant 0 : index
    %46 = vector.load %arg3[%c4_32, %c0_33, %c0_34] : memref<12x1x128xf32, #tpu.memory_space<vmem>>, vector<1x1x128xf32>
    %47 = vector.shape_cast %46 : vector<1x1x128xf32> to vector<1x128xf32>
    %48 = vector.broadcast %47 : vector<1x128xf32> to vector<8x128xf32>
    %49 = arith.addf %45, %48 : vector<8x128xf32>
    %cst_35 = arith.constant 0.000000e+00 : f32
    %50 = vector.broadcast %cst_35 : f32 to vector<8x128xf32>
    %51 = arith.maximumf %49, %50 : vector<8x128xf32>
    %52 = arith.truncf %51 : vector<8x128xf32> to vector<8x128xbf16>
    %c5 = arith.constant 5 : index
    %c0_36 = arith.constant 0 : index
    %c0_37 = arith.constant 0 : index
    %53 = vector.load %arg2[%c5, %c0_36, %c0_37] : memref<12x128x128xbf16, #tpu.memory_space<vmem>>, vector<1x128x128xbf16>
    %54 = vector.shape_cast %53 : vector<1x128x128xbf16> to vector<128x128xbf16>
    %cst_38 = arith.constant dense<0.000000e+00> : vector<8x128xf32>
    %55 = tpu.matmul %52, %54, %cst_38 {dimension_numbers = #tpu.dot_dimension_numbers<[1], [0], [0], [1], [0, 0, 1, 1], [], []>} : vector<8x128xbf16>, vector<128x128xbf16>, vector<8x128xf32> -> vector<8x128xf32>
    %c5_39 = arith.constant 5 : index
    %c0_40 = arith.constant 0 : index
    %c0_41 = arith.constant 0 : index
    %56 = vector.load %arg3[%c5_39, %c0_40, %c0_41] : memref<12x1x128xf32, #tpu.memory_space<vmem>>, vector<1x1x128xf32>
    %57 = vector.shape_cast %56 : vector<1x1x128xf32> to vector<1x128xf32>
    %58 = vector.broadcast %57 : vector<1x128xf32> to vector<8x128xf32>
    %59 = arith.addf %55, %58 : vector<8x128xf32>
    %60 = arith.addf %59, %41 : vector<8x128xf32>
    %cst_42 = arith.constant 0.000000e+00 : f32
    %61 = vector.broadcast %cst_42 : f32 to vector<8x128xf32>
    %62 = arith.maximumf %60, %61 : vector<8x128xf32>
    %63 = arith.truncf %62 : vector<8x128xf32> to vector<8x128xbf16>
    %c6 = arith.constant 6 : index
    %c0_43 = arith.constant 0 : index
    %c0_44 = arith.constant 0 : index
    %64 = vector.load %arg2[%c6, %c0_43, %c0_44] : memref<12x128x128xbf16, #tpu.memory_space<vmem>>, vector<1x128x128xbf16>
    %65 = vector.shape_cast %64 : vector<1x128x128xbf16> to vector<128x128xbf16>
    %cst_45 = arith.constant dense<0.000000e+00> : vector<8x128xf32>
    %66 = tpu.matmul %63, %65, %cst_45 {dimension_numbers = #tpu.dot_dimension_numbers<[1], [0], [0], [1], [0, 0, 1, 1], [], []>} : vector<8x128xbf16>, vector<128x128xbf16>, vector<8x128xf32> -> vector<8x128xf32>
    %c6_46 = arith.constant 6 : index
    %c0_47 = arith.constant 0 : index
    %c0_48 = arith.constant 0 : index
    %67 = vector.load %arg3[%c6_46, %c0_47, %c0_48] : memref<12x1x128xf32, #tpu.memory_space<vmem>>, vector<1x1x128xf32>
    %68 = vector.shape_cast %67 : vector<1x1x128xf32> to vector<1x128xf32>
    %69 = vector.broadcast %68 : vector<1x128xf32> to vector<8x128xf32>
    %70 = arith.addf %66, %69 : vector<8x128xf32>
    %cst_49 = arith.constant 0.000000e+00 : f32
    %71 = vector.broadcast %cst_49 : f32 to vector<8x128xf32>
    %72 = arith.maximumf %70, %71 : vector<8x128xf32>
    %73 = arith.truncf %72 : vector<8x128xf32> to vector<8x128xbf16>
    %c7 = arith.constant 7 : index
    %c0_50 = arith.constant 0 : index
    %c0_51 = arith.constant 0 : index
    %74 = vector.load %arg2[%c7, %c0_50, %c0_51] : memref<12x128x128xbf16, #tpu.memory_space<vmem>>, vector<1x128x128xbf16>
    %75 = vector.shape_cast %74 : vector<1x128x128xbf16> to vector<128x128xbf16>
    %cst_52 = arith.constant dense<0.000000e+00> : vector<8x128xf32>
    %76 = tpu.matmul %73, %75, %cst_52 {dimension_numbers = #tpu.dot_dimension_numbers<[1], [0], [0], [1], [0, 0, 1, 1], [], []>} : vector<8x128xbf16>, vector<128x128xbf16>, vector<8x128xf32> -> vector<8x128xf32>
    %c7_53 = arith.constant 7 : index
    %c0_54 = arith.constant 0 : index
    %c0_55 = arith.constant 0 : index
    %77 = vector.load %arg3[%c7_53, %c0_54, %c0_55] : memref<12x1x128xf32, #tpu.memory_space<vmem>>, vector<1x1x128xf32>
    %78 = vector.shape_cast %77 : vector<1x1x128xf32> to vector<1x128xf32>
    %79 = vector.broadcast %78 : vector<1x128xf32> to vector<8x128xf32>
    %80 = arith.addf %76, %79 : vector<8x128xf32>
    %81 = arith.addf %80, %62 : vector<8x128xf32>
    %cst_56 = arith.constant 0.000000e+00 : f32
    %82 = vector.broadcast %cst_56 : f32 to vector<8x128xf32>
    %83 = arith.maximumf %81, %82 : vector<8x128xf32>
    %84 = arith.truncf %83 : vector<8x128xf32> to vector<8x128xbf16>
    %c8 = arith.constant 8 : index
    %c0_57 = arith.constant 0 : index
    %c0_58 = arith.constant 0 : index
    %85 = vector.load %arg2[%c8, %c0_57, %c0_58] : memref<12x128x128xbf16, #tpu.memory_space<vmem>>, vector<1x128x128xbf16>
    %86 = vector.shape_cast %85 : vector<1x128x128xbf16> to vector<128x128xbf16>
    %cst_59 = arith.constant dense<0.000000e+00> : vector<8x128xf32>
    %87 = tpu.matmul %84, %86, %cst_59 {dimension_numbers = #tpu.dot_dimension_numbers<[1], [0], [0], [1], [0, 0, 1, 1], [], []>} : vector<8x128xbf16>, vector<128x128xbf16>, vector<8x128xf32> -> vector<8x128xf32>
    %c8_60 = arith.constant 8 : index
    %c0_61 = arith.constant 0 : index
    %c0_62 = arith.constant 0 : index
    %88 = vector.load %arg3[%c8_60, %c0_61, %c0_62] : memref<12x1x128xf32, #tpu.memory_space<vmem>>, vector<1x1x128xf32>
    %89 = vector.shape_cast %88 : vector<1x1x128xf32> to vector<1x128xf32>
    %90 = vector.broadcast %89 : vector<1x128xf32> to vector<8x128xf32>
    %91 = arith.addf %87, %90 : vector<8x128xf32>
    %cst_63 = arith.constant 0.000000e+00 : f32
    %92 = vector.broadcast %cst_63 : f32 to vector<8x128xf32>
    %93 = arith.maximumf %91, %92 : vector<8x128xf32>
    %94 = arith.truncf %93 : vector<8x128xf32> to vector<8x128xbf16>
    %c9 = arith.constant 9 : index
    %c0_64 = arith.constant 0 : index
    %c0_65 = arith.constant 0 : index
    %95 = vector.load %arg2[%c9, %c0_64, %c0_65] : memref<12x128x128xbf16, #tpu.memory_space<vmem>>, vector<1x128x128xbf16>
    %96 = vector.shape_cast %95 : vector<1x128x128xbf16> to vector<128x128xbf16>
    %cst_66 = arith.constant dense<0.000000e+00> : vector<8x128xf32>
    %97 = tpu.matmul %94, %96, %cst_66 {dimension_numbers = #tpu.dot_dimension_numbers<[1], [0], [0], [1], [0, 0, 1, 1], [], []>} : vector<8x128xbf16>, vector<128x128xbf16>, vector<8x128xf32> -> vector<8x128xf32>
    %c9_67 = arith.constant 9 : index
    %c0_68 = arith.constant 0 : index
    %c0_69 = arith.constant 0 : index
    %98 = vector.load %arg3[%c9_67, %c0_68, %c0_69] : memref<12x1x128xf32, #tpu.memory_space<vmem>>, vector<1x1x128xf32>
    %99 = vector.shape_cast %98 : vector<1x1x128xf32> to vector<1x128xf32>
    %100 = vector.broadcast %99 : vector<1x128xf32> to vector<8x128xf32>
    %101 = arith.addf %97, %100 : vector<8x128xf32>
    %cst_70 = arith.constant 0.000000e+00 : f32
    %102 = vector.broadcast %cst_70 : f32 to vector<8x128xf32>
    %103 = arith.maximumf %101, %102 : vector<8x128xf32>
    %104 = arith.truncf %103 : vector<8x128xf32> to vector<8x128xbf16>
    %c10 = arith.constant 10 : index
    %c0_71 = arith.constant 0 : index
    %c0_72 = arith.constant 0 : index
    %105 = vector.load %arg2[%c10, %c0_71, %c0_72] : memref<12x128x128xbf16, #tpu.memory_space<vmem>>, vector<1x128x128xbf16>
    %106 = vector.shape_cast %105 : vector<1x128x128xbf16> to vector<128x128xbf16>
    %cst_73 = arith.constant dense<0.000000e+00> : vector<8x128xf32>
    %107 = tpu.matmul %104, %106, %cst_73 {dimension_numbers = #tpu.dot_dimension_numbers<[1], [0], [0], [1], [0, 0, 1, 1], [], []>} : vector<8x128xbf16>, vector<128x128xbf16>, vector<8x128xf32> -> vector<8x128xf32>
    %c10_74 = arith.constant 10 : index
    %c0_75 = arith.constant 0 : index
    %c0_76 = arith.constant 0 : index
    %108 = vector.load %arg3[%c10_74, %c0_75, %c0_76] : memref<12x1x128xf32, #tpu.memory_space<vmem>>, vector<1x1x128xf32>
    %109 = vector.shape_cast %108 : vector<1x1x128xf32> to vector<1x128xf32>
    %110 = vector.broadcast %109 : vector<1x128xf32> to vector<8x128xf32>
    %111 = arith.addf %107, %110 : vector<8x128xf32>
    %cst_77 = arith.constant 0.000000e+00 : f32
    %112 = vector.broadcast %cst_77 : f32 to vector<8x128xf32>
    %113 = arith.maximumf %111, %112 : vector<8x128xf32>
    %114 = arith.truncf %113 : vector<8x128xf32> to vector<8x128xbf16>
    %c11 = arith.constant 11 : index
    %c0_78 = arith.constant 0 : index
    %c0_79 = arith.constant 0 : index
    %115 = vector.load %arg2[%c11, %c0_78, %c0_79] : memref<12x128x128xbf16, #tpu.memory_space<vmem>>, vector<1x128x128xbf16>
    %116 = vector.shape_cast %115 : vector<1x128x128xbf16> to vector<128x128xbf16>
    %cst_80 = arith.constant dense<0.000000e+00> : vector<8x128xf32>
    %117 = tpu.matmul %114, %116, %cst_80 {dimension_numbers = #tpu.dot_dimension_numbers<[1], [0], [0], [1], [0, 0, 1, 1], [], []>} : vector<8x128xbf16>, vector<128x128xbf16>, vector<8x128xf32> -> vector<8x128xf32>
    %c11_81 = arith.constant 11 : index
    %c0_82 = arith.constant 0 : index
    %c0_83 = arith.constant 0 : index
    %118 = vector.load %arg3[%c11_81, %c0_82, %c0_83] : memref<12x1x128xf32, #tpu.memory_space<vmem>>, vector<1x1x128xf32>
    %119 = vector.shape_cast %118 : vector<1x1x128xf32> to vector<1x128xf32>
    %120 = vector.broadcast %119 : vector<1x128xf32> to vector<8x128xf32>
    %121 = arith.addf %117, %120 : vector<8x128xf32>
    %c0_84 = arith.constant 0 : index
    %c0_85 = arith.constant 0 : index
    %122 = vector.load %arg4[%c0_84, %c0_85] : memref<8x128xf32, #tpu.memory_space<vmem>>, vector<8x128xf32>
    tpu.vector_store %arg4[%c0_84, %c0_85], %121 {strides = array<i32>} : memref<8x128xf32, #tpu.memory_space<vmem>>, vector<8x128xf32>,
    return
  }
  func.func @transform_0(%arg0: i32) -> (i32, i32) {
    %c0_i32 = arith.constant 0 : i32
    %c0_i32_0 = arith.constant 0 : i32
    return %arg0, %c0_i32 : i32, i32
  }
  func.func @transform_1(%arg0: i32) -> (i32, i32, i32) {
    %c0_i32 = arith.constant 0 : i32
    %c0_i32_0 = arith.constant 0 : i32
    %c0_i32_1 = arith.constant 0 : i32
    %c0_i32_2 = arith.constant 0 : i32
    return %c0_i32, %c0_i32_0, %c0_i32_1 : i32, i32, i32
  }
  func.func @transform_2(%arg0: i32) -> (i32, i32, i32) {
    %c0_i32 = arith.constant 0 : i32
    %c0_i32_0 = arith.constant 0 : i32
    %c0_i32_1 = arith.constant 0 : i32
    %c0_i32_2 = arith.constant 0 : i32
    return %c0_i32, %c0_i32_0, %c0_i32_1 : i32, i32, i32
  }
  func.func @transform_3(%arg0: i32) -> (i32, i32) {
    %c0_i32 = arith.constant 0 : i32
    %c0_i32_0 = arith.constant 0 : i32
    return %arg0, %c0_i32 : i32, i32
  }
}

</mosaic_0001>

<llo_original>
// kernel: tpu_custom_call.1
$region0: #{tpu_custom_call.1}
  #allocation0 [shape = 'u32[]', space=smem, size = 0x4, offset = 0x4, fixed_abs, tag = 'smem constant byte address 0x4 - core index']
  #allocation1 [shape = 'u32[144,128]{1,0:T(1,128)}', space=vmem, size = 0x12000, scoped, tag = 'internal scratch']
  %s0 = inlined_call_operand.hbm [shape: f32[8,128], index: 0, kind: input, shape index: {}]
  %s1 = inlined_call_operand.hbm [shape: bf16[12,128,128], index: 1, kind: input, shape index: {}]
  %s2 = inlined_call_operand.hbm [shape: f32[12,1,128], index: 2, kind: input, shape index: {}]
  %s3 = inlined_call_operand.hbm [shape: f32[8,128], index: 3, kind: output, shape index: {}]
  %s4 = sld [smem:[#allocation0]]
  $region34: #{tpu_custom_call.1} parent=0
    _
  %s6 = ssub.s32 1, %s4
  %s7 = scalar_select 0, %s6, %s4
  $region1: #{tpu_custom_call.1} parent=0
    #allocation2 [shape = 'u8[4096]{0}', space=vmem, size = 0x1000, scoped, tag = 'input window, operand 0, single buffered']
    #allocation3 [shape = 's32[1]{0}', space=sflag, size = 0x4, scoped, tag = 'scoped memory for tpu_custom_call.1']
    #allocation4 [shape = 's32[1]{0}', space=sflag, size = 0x4, scoped, tag = 'scoped memory for tpu_custom_call.1']
    #allocation5 [shape = 'u8[393216]{0}', space=vmem, size = 0x60000, scoped, tag = 'input window, operand 1, single buffered']
    #allocation6 [shape = 's32[1]{0}', space=sflag, size = 0x4, scoped, tag = 'scoped memory for tpu_custom_call.1']
    #allocation7 [shape = 'u8[6144]{0}', space=vmem, size = 0x1800, scoped, tag = 'input window, operand 2, single buffered']
    #allocation8 [shape = 'u8[4096]{0}', space=vmem, size = 0x1000, scoped, tag = 'output window, operand 0, single buffered']
    %8 = vsyncpa [#allocation3], 0
    %9 = vsyncpa [#allocation6], 0
    %10 = vsyncpa [#allocation4], 0
    // Predicated region
    $region2: #{tpu_custom_call.1} parent=1 // pred_check
      _
    $region3: #{tpu_custom_call.1} parent=1 // pred_check_branch
      %12 = sbr.rel (0) target = $region5
    $region4: #{tpu_custom_call.1} parent=1 // pred_region
      %s14 = ssub.s32 128, 128
      %15 = vsyncadd [#allocation3], %s14
      %s17 = sshll.u32 [#allocation2], 4
      %s18 = int_to_ptr.vmem [resolvable:$true] %s17
      %20 = dma.hbm_to_vmem [thread:$0]  %s0, 128, %s18, [#allocation3]
    $region5: #{tpu_custom_call.1} parent=1 // pred_fallthru
      _
    // Predicated region
    $region6: #{tpu_custom_call.1} parent=1 // pred_check
      _
    $region7: #{tpu_custom_call.1} parent=1 // pred_check_branch
      %22 = sbr.rel (0) target = $region9
    $region8: #{tpu_custom_call.1} parent=1 // pred_region
      %s24 = ssub.s32 12288, 12288
      %25 = vsyncadd [#allocation6], %s24
      %s26 = sshll.u32 [#allocation5], 4
      %s27 = int_to_ptr.vmem [resolvable:$true] %s26
      %32 = dma.hbm_to_vmem [thread:$0]  %s1, 12288, %s27, [#allocation6], 64, 64, 4
    $region9: #{tpu_custom_call.1} parent=1 // pred_fallthru
      _
    // Predicated region
    $region10: #{tpu_custom_call.1} parent=1 // pred_check
      _
    $region11: #{tpu_custom_call.1} parent=1 // pred_check_branch
      %34 = sbr.rel (0) target = $region13
    $region12: #{tpu_custom_call.1} parent=1 // pred_region
      %s36 = ssub.s32 192, 192
      %37 = vsyncadd [#allocation6], %s36
      %s38 = sshll.u32 [#allocation7], 4
      %s39 = int_to_ptr.vmem [resolvable:$true] %s38
      %44 = dma.hbm_to_vmem [thread:$0]  %s2, 192, %s39, [#allocation6], 16, 16, 1
    $region13: #{tpu_custom_call.1} parent=1 // pred_fallthru
      _
    // Predicated region
    $region14: #{tpu_custom_call.1} parent=1 // pred_check
      _
    $region15: #{tpu_custom_call.1} parent=1 // pred_check_branch
      %46 = sbr.rel (0) target = $region17
    $region16: #{tpu_custom_call.1} parent=1 // pred_region
      %47 = dma.done [#allocation3], 128
    $region17: #{tpu_custom_call.1} parent=1 // pred_fallthru
      _
    // Predicated region
    $region18: #{tpu_custom_call.1} parent=1 // pred_check
      _
    $region19: #{tpu_custom_call.1} parent=1 // pred_check_branch
      %49 = sbr.rel (0) target = $region21
    $region20: #{tpu_custom_call.1} parent=1 // pred_region
      %50 = dma.done [#allocation6], 12288
    $region21: #{tpu_custom_call.1} parent=1 // pred_fallthru
      _
    // Predicated region
    $region22: #{tpu_custom_call.1} parent=1 // pred_check
      _
    $region23: #{tpu_custom_call.1} parent=1 // pred_check_branch
      %52 = sbr.rel (0) target = $region25
    $region24: #{tpu_custom_call.1} parent=1 // pred_region
      %53 = dma.done [#allocation6], 192
    $region25: #{tpu_custom_call.1} parent=1 // pred_fallthru
      _
    %v55 = vld [vmem:[#allocation2] sm:$0xff]
    %v56 = vpack.c.bf16 %v55, %v55
    %v57 = vld [vmem:[#allocation5] sm:$0xf]
    %v58 = vld [vmem:[#allocation5 + $0x4] sm:$0xf]
    %v59 = vld [vmem:[#allocation5 + $0x8] sm:$0xf]
    %v60 = vld [vmem:[#allocation5 + $0xc] sm:$0xf]
    %v61 = vld [vmem:[#allocation5 + $0x10] sm:$0xf]
    %v62 = vld [vmem:[#allocation5 + $0x14] sm:$0xf]
    %v63 = vld [vmem:[#allocation5 + $0x18] sm:$0xf]
    %v64 = vld [vmem:[#allocation5 + $0x1c] sm:$0xf]
    %v65 = vld [vmem:[#allocation5 + $0x20] sm:$0xf]
    %v66 = vld [vmem:[#allocation5 + $0x24] sm:$0xf]
    %v67 = vld [vmem:[#allocation5 + $0x28] sm:$0xf]
    %v68 = vld [vmem:[#allocation5 + $0x2c] sm:$0xf]
    %v69 = vld [vmem:[#allocation5 + $0x30] sm:$0xf]
    %v70 = vld [vmem:[#allocation5 + $0x34] sm:$0xf]
    %v71 = vld [vmem:[#allocation5 + $0x38] sm:$0xf]
    %v72 = vld [vmem:[#allocation5 + $0x3c] sm:$0xf]
    %v73 = vld [vmem:[#allocation7] sm:$0x1]
    %v75 = vlaneseq
    %v76 = vshrl.u32 %v75, 7
    %v77 = vsub.s32 0, %v76
    %v78 = vrot.slane %v73, %v77
    %v96 = vunpack.c.l.b16 %v57
    %v97 = vunpack.c.l.b16 %v58
    %v98 = vunpack.c.l.b16 %v59
    %v99 = vunpack.c.l.b16 %v60
    %v100 = vunpack.c.l.b16 %v61
    %v101 = vunpack.c.l.b16 %v62
    %v102 = vunpack.c.l.b16 %v63
    %v103 = vunpack.c.l.b16 %v64
    %v104 = vunpack.c.l.b16 %v65
    %v105 = vunpack.c.l.b16 %v66
    %v106 = vunpack.c.l.b16 %v67
    %v107 = vunpack.c.l.b16 %v68
    %v108 = vunpack.c.l.b16 %v69
    %v109 = vunpack.c.l.b16 %v70
    %v110 = vunpack.c.l.b16 %v71
    %v111 = vunpack.c.l.b16 %v72
    %v112 = vpack.c.b16 %v97, %v96
    %v113 = vpack.c.b16 %v99, %v98
    %v114 = vpack.c.b16 %v101, %v100
    %v115 = vpack.c.b16 %v103, %v102
    %v116 = vpack.c.b16 %v105, %v104
    %v117 = vpack.c.b16 %v107, %v106
    %v118 = vpack.c.b16 %v109, %v108
    %v119 = vpack.c.b16 %v111, %v110
    %128 = vmatprep.subr.bf16.mxu0 0
    %129 = vmatpush1.bf16.msra.mxu0 %v119
    %130 = vmatprep.subr.bf16.mxu0 0
    %131 = vmatpush1.bf16.msra.mxu0 %v118
    %132 = vmatprep.subr.bf16.mxu0 0
    %133 = vmatpush1.bf16.msra.mxu0 %v117
    %134 = vmatprep.subr.bf16.mxu0 0
    %135 = vmatpush1.bf16.msra.mxu0 %v116
    %136 = vmatprep.subr.bf16.mxu0 0
    %137 = vmatpush1.bf16.msra.mxu0 %v115
    %138 = vmatprep.subr.bf16.mxu0 0
    %139 = vmatpush1.bf16.msra.mxu0 %v114
    %140 = vmatprep.subr.bf16.mxu0 0
    %141 = vmatpush1.bf16.msra.mxu0 %v113
    %142 = vmatprep.subr.bf16.mxu0 0
    %143 = vmatpush1.bf16.msra.mxu0 %v112
    %144 = vmatprep.subr.bf16.mxu0 0
    %145 = vmatpush2.bf16.msra.mxu0 0
    %146 = vmatprep.subr.bf16.mxu0 0
    %147 = vmatpush2.bf16.msra.mxu0 0
    %148 = vmatprep.subr.bf16.mxu0 0
    %149 = vmatpush2.bf16.msra.mxu0 0
    %150 = vmatprep.subr.bf16.mxu0 0
    %151 = vmatpush2.bf16.msra.mxu0 0
    %152 = vmatprep.subr.bf16.mxu0 0
    %153 = vmatpush2.bf16.msra.mxu0 0
    %154 = vmatprep.subr.bf16.mxu0 0
    %155 = vmatpush2.bf16.msra.mxu0 0
    %156 = vmatprep.subr.bf16.mxu0 0
    %157 = vmatpush2.bf16.msra.mxu0 0
    %158 = vmatprep.subr.bf16.mxu0 0
    %159 = vmatpush2.bf16.msra.mxu0 0
    %160 = vmatprep.mubr.bf16.mxu0 0
    %161 = vmatmul.mubr.bf16.gmra.mxu0 %v56
    %v162 = vpop.f32.mrf.mxu0
    %v163 = vadd.f32 %v78, %v162
    %v164 = vpop.f32.mrf.mxu0
    %v165 = vpop.f32.mrf.mxu0
    %v166 = vpop.f32.mrf.mxu0
    %167 = vdwg.mxu0
    %v168 = vmax.f32 %v163, 0.0
    %v169 = vpack.c.bf16 %v168, %v168
    %s170 = scalar_lea.vmem [#allocation5], 64
    %v171 = vld [vmem:[%s170] sm:$0xf]
    %v172 = vld [vmem:[%s170 + $0x4] sm:$0xf]
    %v173 = vld [vmem:[%s170 + $0x8] sm:$0xf]
    %v174 = vld [vmem:[%s170 + $0xc] sm:$0xf]
    %v175 = vld [vmem:[%s170 + $0x10] sm:$0xf]
    %v176 = vld [vmem:[%s170 + $0x14] sm:$0xf]
    %v177 = vld [vmem:[%s170 + $0x18] sm:$0xf]
    %v178 = vld [vmem:[%s170 + $0x1c] sm:$0xf]
    %v179 = vld [vmem:[%s170 + $0x20] sm:$0xf]
    %v180 = vld [vmem:[%s170 + $0x24] sm:$0xf]
    %v181 = vld [vmem:[%s170 + $0x28] sm:$0xf]
    %v182 = vld [vmem:[%s170 + $0x2c] sm:$0xf]
    %v183 = vld [vmem:[%s170 + $0x30] sm:$0xf]
    %v184 = vld [vmem:[%s170 + $0x34] sm:$0xf]
    %v185 = vld [vmem:[%s170 + $0x38] sm:$0xf]
    %v186 = vld [vmem:[%s170 + $0x3c] sm:$0xf]
    %s187 = scalar_lea.vmem [#allocation7], 1
    %v188 = vld [vmem:[%s187] sm:$0x1]
    %v190 = vlaneseq
    %v191 = vshrl.u32 %v190, 7
    %v192 = vsub.s32 0, %v191
    %v193 = vrot.slane %v188, %v192
    %v211 = vunpack.c.l.b16 %v171
    %v212 = vunpack.c.l.b16 %v172
    %v213 = vunpack.c.l.b16 %v173
    %v214 = vunpack.c.l.b16 %v174
    %v215 = vunpack.c.l.b16 %v175
    %v216 = vunpack.c.l.b16 %v176
    %v217 = vunpack.c.l.b16 %v177
    %v218 = vunpack.c.l.b16 %v178
    %v219 = vunpack.c.l.b16 %v179
    %v220 = vunpack.c.l.b16 %v180
    %v221 = vunpack.c.l.b16 %v181
    %v222 = vunpack.c.l.b16 %v182
    %v223 = vunpack.c.l.b16 %v183
    %v224 = vunpack.c.l.b16 %v184
    %v225 = vunpack.c.l.b16 %v185
    %v226 = vunpack.c.l.b16 %v186
    %v227 = vpack.c.b16 %v212, %v211
    %v228 = vpack.c.b16 %v214, %v213
    %v229 = vpack.c.b16 %v216, %v215
    %v230 = vpack.c.b16 %v218, %v217
    %v231 = vpack.c.b16 %v220, %v219
    %v232 = vpack.c.b16 %v222, %v221
    %v233 = vpack.c.b16 %v224, %v223
    %v234 = vpack.c.b16 %v226, %v225
    %243 = vmatprep.subr.bf16.mxu0 0
    %244 = vmatpush1.bf16.msra.mxu0 %v234
    %245 = vmatprep.subr.bf16.mxu0 0
    %246 = vmatpush1.bf16.msra.mxu0 %v233
    %247 = vmatprep.subr.bf16.mxu0 0
    %248 = vmatpush1.bf16.msra.mxu0 %v232
    %249 = vmatprep.subr.bf16.mxu0 0
    %250 = vmatpush1.bf16.msra.mxu0 %v231
    %251 = vmatprep.subr.bf16.mxu0 0
    %252 = vmatpush1.bf16.msra.mxu0 %v230
    %253 = vmatprep.subr.bf16.mxu0 0
    %254 = vmatpush1.bf16.msra.mxu0 %v229
    %255 = vmatprep.subr.bf16.mxu0 0
    %256 = vmatpush1.bf16.msra.mxu0 %v228
    %257 = vmatprep.subr.bf16.mxu0 0
    %258 = vmatpush1.bf16.msra.mxu0 %v227
    %259 = vmatprep.subr.bf16.mxu0 0
    %260 = vmatpush2.bf16.msra.mxu0 0
    %261 = vmatprep.subr.bf16.mxu0 0
    %262 = vmatpush2.bf16.msra.mxu0 0
    %263 = vmatprep.subr.bf16.mxu0 0
    %264 = vmatpush2.bf16.msra.mxu0 0
    %265 = vmatprep.subr.bf16.mxu0 0
    %266 = vmatpush2.bf16.msra.mxu0 0
    %267 = vmatprep.subr.bf16.mxu0 0
    %268 = vmatpush2.bf16.msra.mxu0 0
    %269 = vmatprep.subr.bf16.mxu0 0
    %270 = vmatpush2.bf16.msra.mxu0 0
    %271 = vmatprep.subr.bf16.mxu0 0
    %272 = vmatpush2.bf16.msra.mxu0 0
    %273 = vmatprep.subr.bf16.mxu0 0
    %274 = vmatpush2.bf16.msra.mxu0 0
    %275 = vmatprep.mubr.bf16.mxu0 0
    %276 = vmatmul.mubr.bf16.gmra.mxu0 %v169
    %v277 = vpop.f32.mrf.mxu0
    %v278 = vadd.f32 %v193, %v277
    %v279 = vpop.f32.mrf.mxu0
    %v280 = vpop.f32.mrf.mxu0
    %v281 = vpop.f32.mrf.mxu0
    %282 = vdwg.mxu0
    %v283 = vmax.f32 %v278, 0.0
    %v284 = vpack.c.bf16 %v283, %v283
    %s285 = scalar_lea.vmem [#allocation5], 128
    %v286 = vld [vmem:[%s285] sm:$0xf]
    %v287 = vld [vmem:[%s285 + $0x4] sm:$0xf]
    %v288 = vld [vmem:[%s285 + $0x8] sm:$0xf]
    %v289 = vld [vmem:[%s285 + $0xc] sm:$0xf]
    %v290 = vld [vmem:[%s285 + $0x10] sm:$0xf]
    %v291 = vld [vmem:[%s285 + $0x14] sm:$0xf]
    %v292 = vld [vmem:[%s285 + $0x18] sm:$0xf]
    %v293 = vld [vmem:[%s285 + $0x1c] sm:$0xf]
    %v294 = vld [vmem:[%s285 + $0x20] sm:$0xf]
    %v295 = vld [vmem:[%s285 + $0x24] sm:$0xf]
    %v296 = vld [vmem:[%s285 + $0x28] sm:$0xf]
    %v297 = vld [vmem:[%s285 + $0x2c] sm:$0xf]
    %v298 = vld [vmem:[%s285 + $0x30] sm:$0xf]
    %v299 = vld [vmem:[%s285 + $0x34] sm:$0xf]
    %v300 = vld [vmem:[%s285 + $0x38] sm:$0xf]
    %v301 = vld [vmem:[%s285 + $0x3c] sm:$0xf]
    %s302 = scalar_lea.vmem [#allocation7], 2
    %v303 = vld [vmem:[%s302] sm:$0x1]
    %v305 = vlaneseq
    %v306 = vshrl.u32 %v305, 7
    %v307 = vsub.s32 0, %v306
    %v308 = vrot.slane %v303, %v307
    %v326 = vunpack.c.l.b16 %v286
    %v327 = vunpack.c.l.b16 %v287
    %v328 = vunpack.c.l.b16 %v288
    %v329 = vunpack.c.l.b16 %v289
    %v330 = vunpack.c.l.b16 %v290
    %v331 = vunpack.c.l.b16 %v291
    %v332 = vunpack.c.l.b16 %v292
    %v333 = vunpack.c.l.b16 %v293
    %v334 = vunpack.c.l.b16 %v294
    %v335 = vunpack.c.l.b16 %v295
    %v336 = vunpack.c.l.b16 %v296
    %v337 = vunpack.c.l.b16 %v297
    %v338 = vunpack.c.l.b16 %v298
    %v339 = vunpack.c.l.b16 %v299
    %v340 = vunpack.c.l.b16 %v300
    %v341 = vunpack.c.l.b16 %v301
    %v342 = vpack.c.b16 %v327, %v326
    %v343 = vpack.c.b16 %v329, %v328
    %v344 = vpack.c.b16 %v331, %v330
    %v345 = vpack.c.b16 %v333, %v332
    %v346 = vpack.c.b16 %v335, %v334
    %v347 = vpack.c.b16 %v337, %v336
    %v348 = vpack.c.b16 %v339, %v338
    %v349 = vpack.c.b16 %v341, %v340
    %358 = vmatprep.subr.bf16.mxu0 0
    %359 = vmatpush1.bf16.msra.mxu0 %v349
    %360 = vmatprep.subr.bf16.mxu0 0
    %361 = vmatpush1.bf16.msra.mxu0 %v348
    %362 = vmatprep.subr.bf16.mxu0 0
    %363 = vmatpush1.bf16.msra.mxu0 %v347
    %364 = vmatprep.subr.bf16.mxu0 0
    %365 = vmatpush1.bf16.msra.mxu0 %v346
    %366 = vmatprep.subr.bf16.mxu0 0
    %367 = vmatpush1.bf16.msra.mxu0 %v345
    %368 = vmatprep.subr.bf16.mxu0 0
    %369 = vmatpush1.bf16.msra.mxu0 %v344
    %370 = vmatprep.subr.bf16.mxu0 0
    %371 = vmatpush1.bf16.msra.mxu0 %v343
    %372 = vmatprep.subr.bf16.mxu0 0
    %373 = vmatpush1.bf16.msra.mxu0 %v342
    %374 = vmatprep.subr.bf16.mxu0 0
    %375 = vmatpush2.bf16.msra.mxu0 0
    %376 = vmatprep.subr.bf16.mxu0 0
    %377 = vmatpush2.bf16.msra.mxu0 0
    %378 = vmatprep.subr.bf16.mxu0 0
    %379 = vmatpush2.bf16.msra.mxu0 0
    %380 = vmatprep.subr.bf16.mxu0 0
    %381 = vmatpush2.bf16.msra.mxu0 0
    %382 = vmatprep.subr.bf16.mxu0 0
    %383 = vmatpush2.bf16.msra.mxu0 0
    %384 = vmatprep.subr.bf16.mxu0 0
    %385 = vmatpush2.bf16.msra.mxu0 0
    %386 = vmatprep.subr.bf16.mxu0 0
    %387 = vmatpush2.bf16.msra.mxu0 0
    %388 = vmatprep.subr.bf16.mxu0 0
    %389 = vmatpush2.bf16.msra.mxu0 0
    %390 = vmatprep.mubr.bf16.mxu0 0
    %391 = vmatmul.mubr.bf16.gmra.mxu0 %v284
    %v392 = vpop.f32.mrf.mxu0
    %v393 = vadd.f32 %v308, %v392
    %v394 = vpop.f32.mrf.mxu0
    %v395 = vpop.f32.mrf.mxu0
    %v396 = vpop.f32.mrf.mxu0
    %397 = vdwg.mxu0
    %v398 = vmax.f32 %v393, 0.0
    %v399 = vpack.c.bf16 %v398, %v398
    %s400 = scalar_lea.vmem [#allocation5], 192
    %v401 = vld [vmem:[%s400] sm:$0xf]
    %v402 = vld [vmem:[%s400 + $0x4] sm:$0xf]
    %v403 = vld [vmem:[%s400 + $0x8] sm:$0xf]
    %v404 = vld [vmem:[%s400 + $0xc] sm:$0xf]
    %v405 = vld [vmem:[%s400 + $0x10] sm:$0xf]
    %v406 = vld [vmem:[%s400 + $0x14] sm:$0xf]
    %v407 = vld [vmem:[%s400 + $0x18] sm:$0xf]
    %v408 = vld [vmem:[%s400 + $0x1c] sm:$0xf]
    %v409 = vld [vmem:[%s400 + $0x20] sm:$0xf]
    %v410 = vld [vmem:[%s400 + $0x24] sm:$0xf]
    %v411 = vld [vmem:[%s400 + $0x28] sm:$0xf]
    %v412 = vld [vmem:[%s400 + $0x2c] sm:$0xf]
    %v413 = vld [vmem:[%s400 + $0x30] sm:$0xf]
    %v414 = vld [vmem:[%s400 + $0x34] sm:$0xf]
    %v415 = vld [vmem:[%s400 + $0x38] sm:$0xf]
    %v416 = vld [vmem:[%s400 + $0x3c] sm:$0xf]
    %s417 = scalar_lea.vmem [#allocation7], 3
    %v418 = vld [vmem:[%s417] sm:$0x1]
    %v420 = vlaneseq
    %v421 = vshrl.u32 %v420, 7
    %v422 = vsub.s32 0, %v421
    %v423 = vrot.slane %v418, %v422
    %v441 = vunpack.c.l.b16 %v401
    %v442 = vunpack.c.l.b16 %v402
    %v443 = vunpack.c.l.b16 %v403
    %v444 = vunpack.c.l.b16 %v404
    %v445 = vunpack.c.l.b16 %v405
    %v446 = vunpack.c.l.b16 %v406
    %v447 = vunpack.c.l.b16 %v407
    %v448 = vunpack.c.l.b16 %v408
    %v449 = vunpack.c.l.b16 %v409
    %v450 = vunpack.c.l.b16 %v410
    %v451 = vunpack.c.l.b16 %v411
    %v452 = vunpack.c.l.b16 %v412
    %v453 = vunpack.c.l.b16 %v413
    %v454 = vunpack.c.l.b16 %v414
    %v455 = vunpack.c.l.b16 %v415
    %v456 = vunpack.c.l.b16 %v416
    %v457 = vpack.c.b16 %v442, %v441
    %v458 = vpack.c.b16 %v444, %v443
    %v459 = vpack.c.b16 %v446, %v445
    %v460 = vpack.c.b16 %v448, %v447
    %v461 = vpack.c.b16 %v450, %v449
    %v462 = vpack.c.b16 %v452, %v451
    %v463 = vpack.c.b16 %v454, %v453
    %v464 = vpack.c.b16 %v456, %v455
    %473 = vmatprep.subr.bf16.mxu0 0
    %474 = vmatpush1.bf16.msra.mxu0 %v464
    %475 = vmatprep.subr.bf16.mxu0 0
    %476 = vmatpush1.bf16.msra.mxu0 %v463
    %477 = vmatprep.subr.bf16.mxu0 0
    %478 = vmatpush1.bf16.msra.mxu0 %v462
    %479 = vmatprep.subr.bf16.mxu0 0
    %480 = vmatpush1.bf16.msra.mxu0 %v461
    %481 = vmatprep.subr.bf16.mxu0 0
    %482 = vmatpush1.bf16.msra.mxu0 %v460
    %483 = vmatprep.subr.bf16.mxu0 0
    %484 = vmatpush1.bf16.msra.mxu0 %v459
    %485 = vmatprep.subr.bf16.mxu0 0
    %486 = vmatpush1.bf16.msra.mxu0 %v458
    %487 = vmatprep.subr.bf16.mxu0 0
    %488 = vmatpush1.bf16.msra.mxu0 %v457
    %489 = vmatprep.subr.bf16.mxu0 0
    %490 = vmatpush2.bf16.msra.mxu0 0
    %491 = vmatprep.subr.bf16.mxu0 0
    %492 = vmatpush2.bf16.msra.mxu0 0
    %493 = vmatprep.subr.bf16.mxu0 0
    %494 = vmatpush2.bf16.msra.mxu0 0
    %495 = vmatprep.subr.bf16.mxu0 0
    %496 = vmatpush2.bf16.msra.mxu0 0
    %497 = vmatprep.subr.bf16.mxu0 0
    %498 = vmatpush2.bf16.msra.mxu0 0
    %499 = vmatprep.subr.bf16.mxu0 0
    %500 = vmatpush2.bf16.msra.mxu0 0
    %501 = vmatprep.subr.bf16.mxu0 0
    %502 = vmatpush2.bf16.msra.mxu0 0
    %503 = vmatprep.subr.bf16.mxu0 0
    %504 = vmatpush2.bf16.msra.mxu0 0
    %505 = vmatprep.mubr.bf16.mxu0 0
    %506 = vmatmul.mubr.bf16.gmra.mxu0 %v399
    %v507 = vpop.f32.mrf.mxu0
    %v508 = vadd.f32 %v423, %v507
    %v509 = vpop.f32.mrf.mxu0
    %v510 = vpop.f32.mrf.mxu0
    %v511 = vpop.f32.mrf.mxu0
    %512 = vdwg.mxu0
    %v513 = vadd.f32 %v508, %v283
    %v514 = vmax.f32 %v513, 0.0
    %v515 = vpack.c.bf16 %v514, %v514
    %s516 = scalar_lea.vmem [#allocation5], 256
    %v517 = vld [vmem:[%s516] sm:$0xf]
    %v518 = vld [vmem:[%s516 + $0x4] sm:$0xf]
    %v519 = vld [vmem:[%s516 + $0x8] sm:$0xf]
    %v520 = vld [vmem:[%s516 + $0xc] sm:$0xf]
    %v521 = vld [vmem:[%s516 + $0x10] sm:$0xf]
    %v522 = vld [vmem:[%s516 + $0x14] sm:$0xf]
    %v523 = vld [vmem:[%s516 + $0x18] sm:$0xf]
    %v524 = vld [vmem:[%s516 + $0x1c] sm:$0xf]
    %v525 = vld [vmem:[%s516 + $0x20] sm:$0xf]
    %v526 = vld [vmem:[%s516 + $0x24] sm:$0xf]
    %v527 = vld [vmem:[%s516 + $0x28] sm:$0xf]
    %v528 = vld [vmem:[%s516 + $0x2c] sm:$0xf]
    %v529 = vld [vmem:[%s516 + $0x30] sm:$0xf]
    %v530 = vld [vmem:[%s516 + $0x34] sm:$0xf]
    %v531 = vld [vmem:[%s516 + $0x38] sm:$0xf]
    %v532 = vld [vmem:[%s516 + $0x3c] sm:$0xf]
    %s533 = scalar_lea.vmem [#allocation7], 4
    %v534 = vld [vmem:[%s533] sm:$0x1]
    %v536 = vlaneseq
    %v537 = vshrl.u32 %v536, 7
    %v538 = vsub.s32 0, %v537
    %v539 = vrot.slane %v534, %v538
    %v557 = vunpack.c.l.b16 %v517
    %v558 = vunpack.c.l.b16 %v518
    %v559 = vunpack.c.l.b16 %v519
    %v560 = vunpack.c.l.b16 %v520
    %v561 = vunpack.c.l.b16 %v521
    %v562 = vunpack.c.l.b16 %v522
    %v563 = vunpack.c.l.b16 %v523
    %v564 = vunpack.c.l.b16 %v524
    %v565 = vunpack.c.l.b16 %v525
    %v566 = vunpack.c.l.b16 %v526
    %v567 = vunpack.c.l.b16 %v527
    %v568 = vunpack.c.l.b16 %v528
    %v569 = vunpack.c.l.b16 %v529
    %v570 = vunpack.c.l.b16 %v530
    %v571 = vunpack.c.l.b16 %v531
    %v572 = vunpack.c.l.b16 %v532
    %v573 = vpack.c.b16 %v558, %v557
    %v574 = vpack.c.b16 %v560, %v559
    %v575 = vpack.c.b16 %v562, %v561
    %v576 = vpack.c.b16 %v564, %v563
    %v577 = vpack.c.b16 %v566, %v565
    %v578 = vpack.c.b16 %v568, %v567
    %v579 = vpack.c.b16 %v570, %v569
    %v580 = vpack.c.b16 %v572, %v571
    %589 = vmatprep.subr.bf16.mxu0 0
    %590 = vmatpush1.bf16.msra.mxu0 %v580
    %591 = vmatprep.subr.bf16.mxu0 0
    %592 = vmatpush1.bf16.msra.mxu0 %v579
    %593 = vmatprep.subr.bf16.mxu0 0
    %594 = vmatpush1.bf16.msra.mxu0 %v578
    %595 = vmatprep.subr.bf16.mxu0 0
    %596 = vmatpush1.bf16.msra.mxu0 %v577
    %597 = vmatprep.subr.bf16.mxu0 0
    %598 = vmatpush1.bf16.msra.mxu0 %v576
    %599 = vmatprep.subr.bf16.mxu0 0
    %600 = vmatpush1.bf16.msra.mxu0 %v575
    %601 = vmatprep.subr.bf16.mxu0 0
    %602 = vmatpush1.bf16.msra.mxu0 %v574
    %603 = vmatprep.subr.bf16.mxu0 0
    %604 = vmatpush1.bf16.msra.mxu0 %v573
    %605 = vmatprep.subr.bf16.mxu0 0
    %606 = vmatpush2.bf16.msra.mxu0 0
    %607 = vmatprep.subr.bf16.mxu0 0
    %608 = vmatpush2.bf16.msra.mxu0 0
    %609 = vmatprep.subr.bf16.mxu0 0
    %610 = vmatpush2.bf16.msra.mxu0 0
    %611 = vmatprep.subr.bf16.mxu0 0
    %612 = vmatpush2.bf16.msra.mxu0 0
    %613 = vmatprep.subr.bf16.mxu0 0
    %614 = vmatpush2.bf16.msra.mxu0 0
    %615 = vmatprep.subr.bf16.mxu0 0
    %616 = vmatpush2.bf16.msra.mxu0 0
    %617 = vmatprep.subr.bf16.mxu0 0
    %618 = vmatpush2.bf16.msra.mxu0 0
    %619 = vmatprep.subr.bf16.mxu0 0
    %620 = vmatpush2.bf16.msra.mxu0 0
    %621 = vmatprep.mubr.bf16.mxu0 0
    %622 = vmatmul.mubr.bf16.gmra.mxu0 %v515
    %v623 = vpop.f32.mrf.mxu0
    %v624 = vadd.f32 %v539, %v623
    %v625 = vpop.f32.mrf.mxu0
    %v626 = vpop.f32.mrf.mxu0
    %v627 = vpop.f32.mrf.mxu0
    %628 = vdwg.mxu0
    %v629 = vmax.f32 %v624, 0.0
    %v630 = vpack.c.bf16 %v629, %v629
    %s631 = scalar_lea.vmem [#allocation5], 320
    %v632 = vld [vmem:[%s631] sm:$0xf]
    %v633 = vld [vmem:[%s631 + $0x4] sm:$0xf]
    %v634 = vld [vmem:[%s631 + $0x8] sm:$0xf]
    %v635 = vld [vmem:[%s631 + $0xc] sm:$0xf]
    %v636 = vld [vmem:[%s631 + $0x10] sm:$0xf]
    %v637 = vld [vmem:[%s631 + $0x14] sm:$0xf]
    %v638 = vld [vmem:[%s631 + $0x18] sm:$0xf]
    %v639 = vld [vmem:[%s631 + $0x1c] sm:$0xf]
    %v640 = vld [vmem:[%s631 + $0x20] sm:$0xf]
    %v641 = vld [vmem:[%s631 + $0x24] sm:$0xf]
    %v642 = vld [vmem:[%s631 + $0x28] sm:$0xf]
    %v643 = vld [vmem:[%s631 + $0x2c] sm:$0xf]
    %v644 = vld [vmem:[%s631 + $0x30] sm:$0xf]
    %v645 = vld [vmem:[%s631 + $0x34] sm:$0xf]
    %v646 = vld [vmem:[%s631 + $0x38] sm:$0xf]
    %v647 = vld [vmem:[%s631 + $0x3c] sm:$0xf]
    %s648 = scalar_lea.vmem [#allocation7], 5
    %v649 = vld [vmem:[%s648] sm:$0x1]
    %v651 = vlaneseq
    %v652 = vshrl.u32 %v651, 7
    %v653 = vsub.s32 0, %v652
    %v654 = vrot.slane %v649, %v653
    %v672 = vunpack.c.l.b16 %v632
    %v673 = vunpack.c.l.b16 %v633
    %v674 = vunpack.c.l.b16 %v634
    %v675 = vunpack.c.l.b16 %v635
    %v676 = vunpack.c.l.b16 %v636
    %v677 = vunpack.c.l.b16 %v637
    %v678 = vunpack.c.l.b16 %v638
    %v679 = vunpack.c.l.b16 %v639
    %v680 = vunpack.c.l.b16 %v640
    %v681 = vunpack.c.l.b16 %v641
    %v682 = vunpack.c.l.b16 %v642
    %v683 = vunpack.c.l.b16 %v643
    %v684 = vunpack.c.l.b16 %v644
    %v685 = vunpack.c.l.b16 %v645
    %v686 = vunpack.c.l.b16 %v646
    %v687 = vunpack.c.l.b16 %v647
    %v688 = vpack.c.b16 %v673, %v672
    %v689 = vpack.c.b16 %v675, %v674
    %v690 = vpack.c.b16 %v677, %v676
    %v691 = vpack.c.b16 %v679, %v678
    %v692 = vpack.c.b16 %v681, %v680
    %v693 = vpack.c.b16 %v683, %v682
    %v694 = vpack.c.b16 %v685, %v684
    %v695 = vpack.c.b16 %v687, %v686
    %704 = vmatprep.subr.bf16.mxu0 0
    %705 = vmatpush1.bf16.msra.mxu0 %v695
    %706 = vmatprep.subr.bf16.mxu0 0
    %707 = vmatpush1.bf16.msra.mxu0 %v694
    %708 = vmatprep.subr.bf16.mxu0 0
    %709 = vmatpush1.bf16.msra.mxu0 %v693
    %710 = vmatprep.subr.bf16.mxu0 0
    %711 = vmatpush1.bf16.msra.mxu0 %v692
    %712 = vmatprep.subr.bf16.mxu0 0
    %713 = vmatpush1.bf16.msra.mxu0 %v691
    %714 = vmatprep.subr.bf16.mxu0 0
    %715 = vmatpush1.bf16.msra.mxu0 %v690
    %716 = vmatprep.subr.bf16.mxu0 0
    %717 = vmatpush1.bf16.msra.mxu0 %v689
    %718 = vmatprep.subr.bf16.mxu0 0
    %719 = vmatpush1.bf16.msra.mxu0 %v688
    %720 = vmatprep.subr.bf16.mxu0 0
    %721 = vmatpush2.bf16.msra.mxu0 0
    %722 = vmatprep.subr.bf16.mxu0 0
    %723 = vmatpush2.bf16.msra.mxu0 0
    %724 = vmatprep.subr.bf16.mxu0 0
    %725 = vmatpush2.bf16.msra.mxu0 0
    %726 = vmatprep.subr.bf16.mxu0 0
    %727 = vmatpush2.bf16.msra.mxu0 0
    %728 = vmatprep.subr.bf16.mxu0 0
    %729 = vmatpush2.bf16.msra.mxu0 0
    %730 = vmatprep.subr.bf16.mxu0 0
    %731 = vmatpush2.bf16.msra.mxu0 0
    %732 = vmatprep.subr.bf16.mxu0 0
    %733 = vmatpush2.bf16.msra.mxu0 0
    %734 = vmatprep.subr.bf16.mxu0 0
    %735 = vmatpush2.bf16.msra.mxu0 0
    %736 = vmatprep.mubr.bf16.mxu0 0
    %737 = vmatmul.mubr.bf16.gmra.mxu0 %v630
    %v738 = vpop.f32.mrf.mxu0
    %v739 = vadd.f32 %v654, %v738
    %v740 = vpop.f32.mrf.mxu0
    %v741 = vpop.f32.mrf.mxu0
    %v742 = vpop.f32.mrf.mxu0
    %743 = vdwg.mxu0
    %v744 = vadd.f32 %v739, %v514
    %v745 = vmax.f32 %v744, 0.0
    %v746 = vpack.c.bf16 %v745, %v745
    %s747 = scalar_lea.vmem [#allocation5], 384
    %v748 = vld [vmem:[%s747] sm:$0xf]
    %v749 = vld [vmem:[%s747 + $0x4] sm:$0xf]
    %v750 = vld [vmem:[%s747 + $0x8] sm:$0xf]
    %v751 = vld [vmem:[%s747 + $0xc] sm:$0xf]
    %v752 = vld [vmem:[%s747 + $0x10] sm:$0xf]
    %v753 = vld [vmem:[%s747 + $0x14] sm:$0xf]
    %v754 = vld [vmem:[%s747 + $0x18] sm:$0xf]
    %v755 = vld [vmem:[%s747 + $0x1c] sm:$0xf]
    %v756 = vld [vmem:[%s747 + $0x20] sm:$0xf]
    %v757 = vld [vmem:[%s747 + $0x24] sm:$0xf]
    %v758 = vld [vmem:[%s747 + $0x28] sm:$0xf]
    %v759 = vld [vmem:[%s747 + $0x2c] sm:$0xf]
    %v760 = vld [vmem:[%s747 + $0x30] sm:$0xf]
    %v761 = vld [vmem:[%s747 + $0x34] sm:$0xf]
    %v762 = vld [vmem:[%s747 + $0x38] sm:$0xf]
    %v763 = vld [vmem:[%s747 + $0x3c] sm:$0xf]
    %s764 = scalar_lea.vmem [#allocation7], 6
    %v765 = vld [vmem:[%s764] sm:$0x1]
    %v767 = vlaneseq
    %v768 = vshrl.u32 %v767, 7
    %v769 = vsub.s32 0, %v768
    %v770 = vrot.slane %v765, %v769
    %v788 = vunpack.c.l.b16 %v748
    %v789 = vunpack.c.l.b16 %v749
    %v790 = vunpack.c.l.b16 %v750
    %v791 = vunpack.c.l.b16 %v751
    %v792 = vunpack.c.l.b16 %v752
    %v793 = vunpack.c.l.b16 %v753
    %v794 = vunpack.c.l.b16 %v754
    %v795 = vunpack.c.l.b16 %v755
    %v796 = vunpack.c.l.b16 %v756
    %v797 = vunpack.c.l.b16 %v757
    %v798 = vunpack.c.l.b16 %v758
    %v799 = vunpack.c.l.b16 %v759
    %v800 = vunpack.c.l.b16 %v760
    %v801 = vunpack.c.l.b16 %v761
    %v802 = vunpack.c.l.b16 %v762
    %v803 = vunpack.c.l.b16 %v763
    %v804 = vpack.c.b16 %v789, %v788
    %v805 = vpack.c.b16 %v791, %v790
    %v806 = vpack.c.b16 %v793, %v792
    %v807 = vpack.c.b16 %v795, %v794
    %v808 = vpack.c.b16 %v797, %v796
    %v809 = vpack.c.b16 %v799, %v798
    %v810 = vpack.c.b16 %v801, %v800
    %v811 = vpack.c.b16 %v803, %v802
    %820 = vmatprep.subr.bf16.mxu0 0
    %821 = vmatpush1.bf16.msra.mxu0 %v811
    %822 = vmatprep.subr.bf16.mxu0 0
    %823 = vmatpush1.bf16.msra.mxu0 %v810
    %824 = vmatprep.subr.bf16.mxu0 0
    %825 = vmatpush1.bf16.msra.mxu0 %v809
    %826 = vmatprep.subr.bf16.mxu0 0
    %827 = vmatpush1.bf16.msra.mxu0 %v808
    %828 = vmatprep.subr.bf16.mxu0 0
    %829 = vmatpush1.bf16.msra.mxu0 %v807
    %830 = vmatprep.subr.bf16.mxu0 0
    %831 = vmatpush1.bf16.msra.mxu0 %v806
    %832 = vmatprep.subr.bf16.mxu0 0
    %833 = vmatpush1.bf16.msra.mxu0 %v805
    %834 = vmatprep.subr.bf16.mxu0 0
    %835 = vmatpush1.bf16.msra.mxu0 %v804
    %836 = vmatprep.subr.bf16.mxu0 0
    %837 = vmatpush2.bf16.msra.mxu0 0
    %838 = vmatprep.subr.bf16.mxu0 0
    %839 = vmatpush2.bf16.msra.mxu0 0
    %840 = vmatprep.subr.bf16.mxu0 0
    %841 = vmatpush2.bf16.msra.mxu0 0
    %842 = vmatprep.subr.bf16.mxu0 0
    %843 = vmatpush2.bf16.msra.mxu0 0
    %844 = vmatprep.subr.bf16.mxu0 0
    %845 = vmatpush2.bf16.msra.mxu0 0
    %846 = vmatprep.subr.bf16.mxu0 0
    %847 = vmatpush2.bf16.msra.mxu0 0
    %848 = vmatprep.subr.bf16.mxu0 0
    %849 = vmatpush2.bf16.msra.mxu0 0
    %850 = vmatprep.subr.bf16.mxu0 0
    %851 = vmatpush2.bf16.msra.mxu0 0
    %852 = vmatprep.mubr.bf16.mxu0 0
    %853 = vmatmul.mubr.bf16.gmra.mxu0 %v746
    %v854 = vpop.f32.mrf.mxu0
    %v855 = vadd.f32 %v770, %v854
    %v856 = vpop.f32.mrf.mxu0
    %v857 = vpop.f32.mrf.mxu0
    %v858 = vpop.f32.mrf.mxu0
    %859 = vdwg.mxu0
    %v860 = vmax.f32 %v855, 0.0
    %v861 = vpack.c.bf16 %v860, %v860
    %s862 = scalar_lea.vmem [#allocation5], 448
    %v863 = vld [vmem:[%s862] sm:$0xf]
    %v864 = vld [vmem:[%s862 + $0x4] sm:$0xf]
    %v865 = vld [vmem:[%s862 + $0x8] sm:$0xf]
    %v866 = vld [vmem:[%s862 + $0xc] sm:$0xf]
    %v867 = vld [vmem:[%s862 + $0x10] sm:$0xf]
    %v868 = vld [vmem:[%s862 + $0x14] sm:$0xf]
    %v869 = vld [vmem:[%s862 + $0x18] sm:$0xf]
    %v870 = vld [vmem:[%s862 + $0x1c] sm:$0xf]
    %v871 = vld [vmem:[%s862 + $0x20] sm:$0xf]
    %v872 = vld [vmem:[%s862 + $0x24] sm:$0xf]
    %v873 = vld [vmem:[%s862 + $0x28] sm:$0xf]
    %v874 = vld [vmem:[%s862 + $0x2c] sm:$0xf]
    %v875 = vld [vmem:[%s862 + $0x30] sm:$0xf]
    %v876 = vld [vmem:[%s862 + $0x34] sm:$0xf]
    %v877 = vld [vmem:[%s862 + $0x38] sm:$0xf]
    %v878 = vld [vmem:[%s862 + $0x3c] sm:$0xf]
    %s879 = scalar_lea.vmem [#allocation7], 7
    %v880 = vld [vmem:[%s879] sm:$0x1]
    %v882 = vlaneseq
    %v883 = vshrl.u32 %v882, 7
    %v884 = vsub.s32 0, %v883
    %v885 = vrot.slane %v880, %v884
    %v903 = vunpack.c.l.b16 %v863
    %v904 = vunpack.c.l.b16 %v864
    %v905 = vunpack.c.l.b16 %v865
    %v906 = vunpack.c.l.b16 %v866
    %v907 = vunpack.c.l.b16 %v867
    %v908 = vunpack.c.l.b16 %v868
    %v909 = vunpack.c.l.b16 %v869
    %v910 = vunpack.c.l.b16 %v870
    %v911 = vunpack.c.l.b16 %v871
    %v912 = vunpack.c.l.b16 %v872
    %v913 = vunpack.c.l.b16 %v873
    %v914 = vunpack.c.l.b16 %v874
    %v915 = vunpack.c.l.b16 %v875
    %v916 = vunpack.c.l.b16 %v876
    %v917 = vunpack.c.l.b16 %v877
    %v918 = vunpack.c.l.b16 %v878
    %v919 = vpack.c.b16 %v904, %v903
    %v920 = vpack.c.b16 %v906, %v905
    %v921 = vpack.c.b16 %v908, %v907
    %v922 = vpack.c.b16 %v910, %v909
    %v923 = vpack.c.b16 %v912, %v911
    %v924 = vpack.c.b16 %v914, %v913
    %v925 = vpack.c.b16 %v916, %v915
    %v926 = vpack.c.b16 %v918, %v917
    %935 = vmatprep.subr.bf16.mxu0 0
    %936 = vmatpush1.bf16.msra.mxu0 %v926
    %937 = vmatprep.subr.bf16.mxu0 0
    %938 = vmatpush1.bf16.msra.mxu0 %v925
    %939 = vmatprep.subr.bf16.mxu0 0
    %940 = vmatpush1.bf16.msra.mxu0 %v924
    %941 = vmatprep.subr.bf16.mxu0 0
    %942 = vmatpush1.bf16.msra.mxu0 %v923
    %943 = vmatprep.subr.bf16.mxu0 0
    %944 = vmatpush1.bf16.msra.mxu0 %v922
    %945 = vmatprep.subr.bf16.mxu0 0
    %946 = vmatpush1.bf16.msra.mxu0 %v921
    %947 = vmatprep.subr.bf16.mxu0 0
    %948 = vmatpush1.bf16.msra.mxu0 %v920
    %949 = vmatprep.subr.bf16.mxu0 0
    %950 = vmatpush1.bf16.msra.mxu0 %v919
    %951 = vmatprep.subr.bf16.mxu0 0
    %952 = vmatpush2.bf16.msra.mxu0 0
    %953 = vmatprep.subr.bf16.mxu0 0
    %954 = vmatpush2.bf16.msra.mxu0 0
    %955 = vmatprep.subr.bf16.mxu0 0
    %956 = vmatpush2.bf16.msra.mxu0 0
    %957 = vmatprep.subr.bf16.mxu0 0
    %958 = vmatpush2.bf16.msra.mxu0 0
    %959 = vmatprep.subr.bf16.mxu0 0
    %960 = vmatpush2.bf16.msra.mxu0 0
    %961 = vmatprep.subr.bf16.mxu0 0
    %962 = vmatpush2.bf16.msra.mxu0 0
    %963 = vmatprep.subr.bf16.mxu0 0
    %964 = vmatpush2.bf16.msra.mxu0 0
    %965 = vmatprep.subr.bf16.mxu0 0
    %966 = vmatpush2.bf16.msra.mxu0 0
    %967 = vmatprep.mubr.bf16.mxu0 0
    %968 = vmatmul.mubr.bf16.gmra.mxu0 %v861
    %v969 = vpop.f32.mrf.mxu0
    %v970 = vadd.f32 %v885, %v969
    %v971 = vpop.f32.mrf.mxu0
    %v972 = vpop.f32.mrf.mxu0
    %v973 = vpop.f32.mrf.mxu0
    %974 = vdwg.mxu0
    %v975 = vadd.f32 %v970, %v745
    %v976 = vmax.f32 %v975, 0.0
    %v977 = vpack.c.bf16 %v976, %v976
    %s978 = scalar_lea.vmem [#allocation5], 512
    %v979 = vld [vmem:[%s978] sm:$0xf]
    %v980 = vld [vmem:[%s978 + $0x4] sm:$0xf]
    %v981 = vld [vmem:[%s978 + $0x8] sm:$0xf]
    %v982 = vld [vmem:[%s978 + $0xc] sm:$0xf]
    %v983 = vld [vmem:[%s978 + $0x10] sm:$0xf]
    %v984 = vld [vmem:[%s978 + $0x14] sm:$0xf]
    %v985 = vld [vmem:[%s978 + $0x18] sm:$0xf]
    %v986 = vld [vmem:[%s978 + $0x1c] sm:$0xf]
    %v987 = vld [vmem:[%s978 + $0x20] sm:$0xf]
    %v988 = vld [vmem:[%s978 + $0x24] sm:$0xf]
    %v989 = vld [vmem:[%s978 + $0x28] sm:$0xf]
    %v990 = vld [vmem:[%s978 + $0x2c] sm:$0xf]
    %v991 = vld [vmem:[%s978 + $0x30] sm:$0xf]
    %v992 = vld [vmem:[%s978 + $0x34] sm:$0xf]
    %v993 = vld [vmem:[%s978 + $0x38] sm:$0xf]
    %v994 = vld [vmem:[%s978 + $0x3c] sm:$0xf]
    %s995 = scalar_lea.vmem [#allocation7], 8
    %v996 = vld [vmem:[%s995] sm:$0x1]
    %v998 = vlaneseq
    %v999 = vshrl.u32 %v998, 7
    %v1000 = vsub.s32 0, %v999
    %v1001 = vrot.slane %v996, %v1000
    %v1019 = vunpack.c.l.b16 %v979
    %v1020 = vunpack.c.l.b16 %v980
    %v1021 = vunpack.c.l.b16 %v981
    %v1022 = vunpack.c.l.b16 %v982
    %v1023 = vunpack.c.l.b16 %v983
    %v1024 = vunpack.c.l.b16 %v984
    %v1025 = vunpack.c.l.b16 %v985
    %v1026 = vunpack.c.l.b16 %v986
    %v1027 = vunpack.c.l.b16 %v987
    %v1028 = vunpack.c.l.b16 %v988
    %v1029 = vunpack.c.l.b16 %v989
    %v1030 = vunpack.c.l.b16 %v990
    %v1031 = vunpack.c.l.b16 %v991
    %v1032 = vunpack.c.l.b16 %v992
    %v1033 = vunpack.c.l.b16 %v993
    %v1034 = vunpack.c.l.b16 %v994
    %v1035 = vpack.c.b16 %v1020, %v1019
    %v1036 = vpack.c.b16 %v1022, %v1021
    %v1037 = vpack.c.b16 %v1024, %v1023
    %v1038 = vpack.c.b16 %v1026, %v1025
    %v1039 = vpack.c.b16 %v1028, %v1027
    %v1040 = vpack.c.b16 %v1030, %v1029
    %v1041 = vpack.c.b16 %v1032, %v1031
    %v1042 = vpack.c.b16 %v1034, %v1033
    %1051 = vmatprep.subr.bf16.mxu0 0
    %1052 = vmatpush1.bf16.msra.mxu0 %v1042
    %1053 = vmatprep.subr.bf16.mxu0 0
    %1054 = vmatpush1.bf16.msra.mxu0 %v1041
    %1055 = vmatprep.subr.bf16.mxu0 0
    %1056 = vmatpush1.bf16.msra.mxu0 %v1040
    %1057 = vmatprep.subr.bf16.mxu0 0
    %1058 = vmatpush1.bf16.msra.mxu0 %v1039
    %1059 = vmatprep.subr.bf16.mxu0 0
    %1060 = vmatpush1.bf16.msra.mxu0 %v1038
    %1061 = vmatprep.subr.bf16.mxu0 0
    %1062 = vmatpush1.bf16.msra.mxu0 %v1037
    %1063 = vmatprep.subr.bf16.mxu0 0
    %1064 = vmatpush1.bf16.msra.mxu0 %v1036
    %1065 = vmatprep.subr.bf16.mxu0 0
    %1066 = vmatpush1.bf16.msra.mxu0 %v1035
    %1067 = vmatprep.subr.bf16.mxu0 0
    %1068 = vmatpush2.bf16.msra.mxu0 0
    %1069 = vmatprep.subr.bf16.mxu0 0
    %1070 = vmatpush2.bf16.msra.mxu0 0
    %1071 = vmatprep.subr.bf16.mxu0 0
    %1072 = vmatpush2.bf16.msra.mxu0 0
    %1073 = vmatprep.subr.bf16.mxu0 0
    %1074 = vmatpush2.bf16.msra.mxu0 0
    %1075 = vmatprep.subr.bf16.mxu0 0
    %1076 = vmatpush2.bf16.msra.mxu0 0
    %1077 = vmatprep.subr.bf16.mxu0 0
    %1078 = vmatpush2.bf16.msra.mxu0 0
    %1079 = vmatprep.subr.bf16.mxu0 0
    %1080 = vmatpush2.bf16.msra.mxu0 0
    %1081 = vmatprep.subr.bf16.mxu0 0
    %1082 = vmatpush2.bf16.msra.mxu0 0
    %1083 = vmatprep.mubr.bf16.mxu0 0
    %1084 = vmatmul.mubr.bf16.gmra.mxu0 %v977
    %v1085 = vpop.f32.mrf.mxu0
    %v1086 = vadd.f32 %v1001, %v1085
    %v1087 = vpop.f32.mrf.mxu0
    %v1088 = vpop.f32.mrf.mxu0
    %v1089 = vpop.f32.mrf.mxu0
    %1090 = vdwg.mxu0
    %v1091 = vmax.f32 %v1086, 0.0
    %v1092 = vpack.c.bf16 %v1091, %v1091
    %s1093 = scalar_lea.vmem [#allocation5], 576
    %v1094 = vld [vmem:[%s1093] sm:$0xf]
    %v1095 = vld [vmem:[%s1093 + $0x4] sm:$0xf]
    %v1096 = vld [vmem:[%s1093 + $0x8] sm:$0xf]
    %v1097 = vld [vmem:[%s1093 + $0xc] sm:$0xf]
    %v1098 = vld [vmem:[%s1093 + $0x10] sm:$0xf]
    %v1099 = vld [vmem:[%s1093 + $0x14] sm:$0xf]
    %v1100 = vld [vmem:[%s1093 + $0x18] sm:$0xf]
    %v1101 = vld [vmem:[%s1093 + $0x1c] sm:$0xf]
    %v1102 = vld [vmem:[%s1093 + $0x20] sm:$0xf]
    %v1103 = vld [vmem:[%s1093 + $0x24] sm:$0xf]
    %v1104 = vld [vmem:[%s1093 + $0x28] sm:$0xf]
    %v1105 = vld [vmem:[%s1093 + $0x2c] sm:$0xf]
    %v1106 = vld [vmem:[%s1093 + $0x30] sm:$0xf]
    %v1107 = vld [vmem:[%s1093 + $0x34] sm:$0xf]
    %v1108 = vld [vmem:[%s1093 + $0x38] sm:$0xf]
    %v1109 = vld [vmem:[%s1093 + $0x3c] sm:$0xf]
    %s1110 = scalar_lea.vmem [#allocation7], 9
    %v1111 = vld [vmem:[%s1110] sm:$0x1]
    %v1113 = vlaneseq
    %v1114 = vshrl.u32 %v1113, 7
    %v1115 = vsub.s32 0, %v1114
    %v1116 = vrot.slane %v1111, %v1115
    %v1134 = vunpack.c.l.b16 %v1094
    %v1135 = vunpack.c.l.b16 %v1095
    %v1136 = vunpack.c.l.b16 %v1096
    %v1137 = vunpack.c.l.b16 %v1097
    %v1138 = vunpack.c.l.b16 %v1098
    %v1139 = vunpack.c.l.b16 %v1099
    %v1140 = vunpack.c.l.b16 %v1100
    %v1141 = vunpack.c.l.b16 %v1101
    %v1142 = vunpack.c.l.b16 %v1102
    %v1143 = vunpack.c.l.b16 %v1103
    %v1144 = vunpack.c.l.b16 %v1104
    %v1145 = vunpack.c.l.b16 %v1105
    %v1146 = vunpack.c.l.b16 %v1106
    %v1147 = vunpack.c.l.b16 %v1107
    %v1148 = vunpack.c.l.b16 %v1108
    %v1149 = vunpack.c.l.b16 %v1109
    %v1150 = vpack.c.b16 %v1135, %v1134
    %v1151 = vpack.c.b16 %v1137, %v1136
    %v1152 = vpack.c.b16 %v1139, %v1138
    %v1153 = vpack.c.b16 %v1141, %v1140
    %v1154 = vpack.c.b16 %v1143, %v1142
    %v1155 = vpack.c.b16 %v1145, %v1144
    %v1156 = vpack.c.b16 %v1147, %v1146
    %v1157 = vpack.c.b16 %v1149, %v1148
    %1166 = vmatprep.subr.bf16.mxu0 0
    %1167 = vmatpush1.bf16.msra.mxu0 %v1157
    %1168 = vmatprep.subr.bf16.mxu0 0
    %1169 = vmatpush1.bf16.msra.mxu0 %v1156
    %1170 = vmatprep.subr.bf16.mxu0 0
    %1171 = vmatpush1.bf16.msra.mxu0 %v1155
    %1172 = vmatprep.subr.bf16.mxu0 0
    %1173 = vmatpush1.bf16.msra.mxu0 %v1154
    %1174 = vmatprep.subr.bf16.mxu0 0
    %1175 = vmatpush1.bf16.msra.mxu0 %v1153
    %1176 = vmatprep.subr.bf16.mxu0 0
    %1177 = vmatpush1.bf16.msra.mxu0 %v1152
    %1178 = vmatprep.subr.bf16.mxu0 0
    %1179 = vmatpush1.bf16.msra.mxu0 %v1151
    %1180 = vmatprep.subr.bf16.mxu0 0
    %1181 = vmatpush1.bf16.msra.mxu0 %v1150
    %1182 = vmatprep.subr.bf16.mxu0 0
    %1183 = vmatpush2.bf16.msra.mxu0 0
    %1184 = vmatprep.subr.bf16.mxu0 0
    %1185 = vmatpush2.bf16.msra.mxu0 0
    %1186 = vmatprep.subr.bf16.mxu0 0
    %1187 = vmatpush2.bf16.msra.mxu0 0
    %1188 = vmatprep.subr.bf16.mxu0 0
    %1189 = vmatpush2.bf16.msra.mxu0 0
    %1190 = vmatprep.subr.bf16.mxu0 0
    %1191 = vmatpush2.bf16.msra.mxu0 0
    %1192 = vmatprep.subr.bf16.mxu0 0
    %1193 = vmatpush2.bf16.msra.mxu0 0
    %1194 = vmatprep.subr.bf16.mxu0 0
    %1195 = vmatpush2.bf16.msra.mxu0 0
    %1196 = vmatprep.subr.bf16.mxu0 0
    %1197 = vmatpush2.bf16.msra.mxu0 0
    %1198 = vmatprep.mubr.bf16.mxu0 0
    %1199 = vmatmul.mubr.bf16.gmra.mxu0 %v1092
    %v1200 = vpop.f32.mrf.mxu0
    %v1201 = vadd.f32 %v1116, %v1200
    %v1202 = vpop.f32.mrf.mxu0
    %v1203 = vpop.f32.mrf.mxu0
    %v1204 = vpop.f32.mrf.mxu0
    %1205 = vdwg.mxu0
    %v1206 = vmax.f32 %v1201, 0.0
    %v1207 = vpack.c.bf16 %v1206, %v1206
    %s1208 = scalar_lea.vmem [#allocation5], 640
    %v1209 = vld [vmem:[%s1208] sm:$0xf]
    %v1210 = vld [vmem:[%s1208 + $0x4] sm:$0xf]
    %v1211 = vld [vmem:[%s1208 + $0x8] sm:$0xf]
    %v1212 = vld [vmem:[%s1208 + $0xc] sm:$0xf]
    %v1213 = vld [vmem:[%s1208 + $0x10] sm:$0xf]
    %v1214 = vld [vmem:[%s1208 + $0x14] sm:$0xf]
    %v1215 = vld [vmem:[%s1208 + $0x18] sm:$0xf]
    %v1216 = vld [vmem:[%s1208 + $0x1c] sm:$0xf]
    %v1217 = vld [vmem:[%s1208 + $0x20] sm:$0xf]
    %v1218 = vld [vmem:[%s1208 + $0x24] sm:$0xf]
    %v1219 = vld [vmem:[%s1208 + $0x28] sm:$0xf]
    %v1220 = vld [vmem:[%s1208 + $0x2c] sm:$0xf]
    %v1221 = vld [vmem:[%s1208 + $0x30] sm:$0xf]
    %v1222 = vld [vmem:[%s1208 + $0x34] sm:$0xf]
    %v1223 = vld [vmem:[%s1208 + $0x38] sm:$0xf]
    %v1224 = vld [vmem:[%s1208 + $0x3c] sm:$0xf]
    %s1225 = scalar_lea.vmem [#allocation7], 10
    %v1226 = vld [vmem:[%s1225] sm:$0x1]
    %v1228 = vlaneseq
    %v1229 = vshrl.u32 %v1228, 7
    %v1230 = vsub.s32 0, %v1229
    %v1231 = vrot.slane %v1226, %v1230
    %v1249 = vunpack.c.l.b16 %v1209
    %v1250 = vunpack.c.l.b16 %v1210
    %v1251 = vunpack.c.l.b16 %v1211
    %v1252 = vunpack.c.l.b16 %v1212
    %v1253 = vunpack.c.l.b16 %v1213
    %v1254 = vunpack.c.l.b16 %v1214
    %v1255 = vunpack.c.l.b16 %v1215
    %v1256 = vunpack.c.l.b16 %v1216
    %v1257 = vunpack.c.l.b16 %v1217
    %v1258 = vunpack.c.l.b16 %v1218
    %v1259 = vunpack.c.l.b16 %v1219
    %v1260 = vunpack.c.l.b16 %v1220
    %v1261 = vunpack.c.l.b16 %v1221
    %v1262 = vunpack.c.l.b16 %v1222
    %v1263 = vunpack.c.l.b16 %v1223
    %v1264 = vunpack.c.l.b16 %v1224
    %v1265 = vpack.c.b16 %v1250, %v1249
    %v1266 = vpack.c.b16 %v1252, %v1251
    %v1267 = vpack.c.b16 %v1254, %v1253
    %v1268 = vpack.c.b16 %v1256, %v1255
    %v1269 = vpack.c.b16 %v1258, %v1257
    %v1270 = vpack.c.b16 %v1260, %v1259
    %v1271 = vpack.c.b16 %v1262, %v1261
    %v1272 = vpack.c.b16 %v1264, %v1263
    %1281 = vmatprep.subr.bf16.mxu0 0
    %1282 = vmatpush1.bf16.msra.mxu0 %v1272
    %1283 = vmatprep.subr.bf16.mxu0 0
    %1284 = vmatpush1.bf16.msra.mxu0 %v1271
    %1285 = vmatprep.subr.bf16.mxu0 0
    %1286 = vmatpush1.bf16.msra.mxu0 %v1270
    %1287 = vmatprep.subr.bf16.mxu0 0
    %1288 = vmatpush1.bf16.msra.mxu0 %v1269
    %1289 = vmatprep.subr.bf16.mxu0 0
    %1290 = vmatpush1.bf16.msra.mxu0 %v1268
    %1291 = vmatprep.subr.bf16.mxu0 0
    %1292 = vmatpush1.bf16.msra.mxu0 %v1267
    %1293 = vmatprep.subr.bf16.mxu0 0
    %1294 = vmatpush1.bf16.msra.mxu0 %v1266
    %1295 = vmatprep.subr.bf16.mxu0 0
    %1296 = vmatpush1.bf16.msra.mxu0 %v1265
    %1297 = vmatprep.subr.bf16.mxu0 0
    %1298 = vmatpush2.bf16.msra.mxu0 0
    %1299 = vmatprep.subr.bf16.mxu0 0
    %1300 = vmatpush2.bf16.msra.mxu0 0
    %1301 = vmatprep.subr.bf16.mxu0 0
    %1302 = vmatpush2.bf16.msra.mxu0 0
    %1303 = vmatprep.subr.bf16.mxu0 0
    %1304 = vmatpush2.bf16.msra.mxu0 0
    %1305 = vmatprep.subr.bf16.mxu0 0
    %1306 = vmatpush2.bf16.msra.mxu0 0
    %1307 = vmatprep.subr.bf16.mxu0 0
    %1308 = vmatpush2.bf16.msra.mxu0 0
    %1309 = vmatprep.subr.bf16.mxu0 0
    %1310 = vmatpush2.bf16.msra.mxu0 0
    %1311 = vmatprep.subr.bf16.mxu0 0
    %1312 = vmatpush2.bf16.msra.mxu0 0
    %1313 = vmatprep.mubr.bf16.mxu0 0
    %1314 = vmatmul.mubr.bf16.gmra.mxu0 %v1207
    %v1315 = vpop.f32.mrf.mxu0
    %v1316 = vadd.f32 %v1231, %v1315
    %v1317 = vpop.f32.mrf.mxu0
    %v1318 = vpop.f32.mrf.mxu0
    %v1319 = vpop.f32.mrf.mxu0
    %1320 = vdwg.mxu0
    %v1321 = vmax.f32 %v1316, 0.0
    %v1322 = vpack.c.bf16 %v1321, %v1321
    %s1323 = scalar_lea.vmem [#allocation5], 704
    %v1324 = vld [vmem:[%s1323] sm:$0xf]
    %v1325 = vld [vmem:[%s1323 + $0x4] sm:$0xf]
    %v1326 = vld [vmem:[%s1323 + $0x8] sm:$0xf]
    %v1327 = vld [vmem:[%s1323 + $0xc] sm:$0xf]
    %v1328 = vld [vmem:[%s1323 + $0x10] sm:$0xf]
    %v1329 = vld [vmem:[%s1323 + $0x14] sm:$0xf]
    %v1330 = vld [vmem:[%s1323 + $0x18] sm:$0xf]
    %v1331 = vld [vmem:[%s1323 + $0x1c] sm:$0xf]
    %v1332 = vld [vmem:[%s1323 + $0x20] sm:$0xf]
    %v1333 = vld [vmem:[%s1323 + $0x24] sm:$0xf]
    %v1334 = vld [vmem:[%s1323 + $0x28] sm:$0xf]
    %v1335 = vld [vmem:[%s1323 + $0x2c] sm:$0xf]
    %v1336 = vld [vmem:[%s1323 + $0x30] sm:$0xf]
    %v1337 = vld [vmem:[%s1323 + $0x34] sm:$0xf]
    %v1338 = vld [vmem:[%s1323 + $0x38] sm:$0xf]
    %v1339 = vld [vmem:[%s1323 + $0x3c] sm:$0xf]
    %s1340 = scalar_lea.vmem [#allocation7], 11
    %v1341 = vld [vmem:[%s1340] sm:$0x1]
    %v1343 = vlaneseq
    %v1344 = vshrl.u32 %v1343, 7
    %v1345 = vsub.s32 0, %v1344
    %v1346 = vrot.slane %v1341, %v1345
    %v1364 = vunpack.c.l.b16 %v1324
    %v1365 = vunpack.c.l.b16 %v1325
    %v1366 = vunpack.c.l.b16 %v1326
    %v1367 = vunpack.c.l.b16 %v1327
    %v1368 = vunpack.c.l.b16 %v1328
    %v1369 = vunpack.c.l.b16 %v1329
    %v1370 = vunpack.c.l.b16 %v1330
    %v1371 = vunpack.c.l.b16 %v1331
    %v1372 = vunpack.c.l.b16 %v1332
    %v1373 = vunpack.c.l.b16 %v1333
    %v1374 = vunpack.c.l.b16 %v1334
    %v1375 = vunpack.c.l.b16 %v1335
    %v1376 = vunpack.c.l.b16 %v1336
    %v1377 = vunpack.c.l.b16 %v1337
    %v1378 = vunpack.c.l.b16 %v1338
    %v1379 = vunpack.c.l.b16 %v1339
    %v1380 = vpack.c.b16 %v1365, %v1364
    %v1381 = vpack.c.b16 %v1367, %v1366
    %v1382 = vpack.c.b16 %v1369, %v1368
    %v1383 = vpack.c.b16 %v1371, %v1370
    %v1384 = vpack.c.b16 %v1373, %v1372
    %v1385 = vpack.c.b16 %v1375, %v1374
    %v1386 = vpack.c.b16 %v1377, %v1376
    %v1387 = vpack.c.b16 %v1379, %v1378
    %1396 = vmatprep.subr.bf16.mxu0 0
    %1397 = vmatpush1.bf16.msra.mxu0 %v1387
    %1398 = vmatprep.subr.bf16.mxu0 0
    %1399 = vmatpush1.bf16.msra.mxu0 %v1386
    %1400 = vmatprep.subr.bf16.mxu0 0
    %1401 = vmatpush1.bf16.msra.mxu0 %v1385
    %1402 = vmatprep.subr.bf16.mxu0 0
    %1403 = vmatpush1.bf16.msra.mxu0 %v1384
    %1404 = vmatprep.subr.bf16.mxu0 0
    %1405 = vmatpush1.bf16.msra.mxu0 %v1383
    %1406 = vmatprep.subr.bf16.mxu0 0
    %1407 = vmatpush1.bf16.msra.mxu0 %v1382
    %1408 = vmatprep.subr.bf16.mxu0 0
    %1409 = vmatpush1.bf16.msra.mxu0 %v1381
    %1410 = vmatprep.subr.bf16.mxu0 0
    %1411 = vmatpush1.bf16.msra.mxu0 %v1380
    %1412 = vmatprep.subr.bf16.mxu0 0
    %1413 = vmatpush2.bf16.msra.mxu0 0
    %1414 = vmatprep.subr.bf16.mxu0 0
    %1415 = vmatpush2.bf16.msra.mxu0 0
    %1416 = vmatprep.subr.bf16.mxu0 0
    %1417 = vmatpush2.bf16.msra.mxu0 0
    %1418 = vmatprep.subr.bf16.mxu0 0
    %1419 = vmatpush2.bf16.msra.mxu0 0
    %1420 = vmatprep.subr.bf16.mxu0 0
    %1421 = vmatpush2.bf16.msra.mxu0 0
    %1422 = vmatprep.subr.bf16.mxu0 0
    %1423 = vmatpush2.bf16.msra.mxu0 0
    %1424 = vmatprep.subr.bf16.mxu0 0
    %1425 = vmatpush2.bf16.msra.mxu0 0
    %1426 = vmatprep.subr.bf16.mxu0 0
    %1427 = vmatpush2.bf16.msra.mxu0 0
    %1428 = vmatprep.mubr.bf16.mxu0 0
    %1429 = vmatmul.mubr.bf16.gmra.mxu0 %v1322
    %v1430 = vpop.f32.mrf.mxu0
    %v1431 = vadd.f32 %v1346, %v1430
    %v1432 = vpop.f32.mrf.mxu0
    %v1433 = vpop.f32.mrf.mxu0
    %v1434 = vpop.f32.mrf.mxu0
    %1435 = vdwg.mxu0
    %1436 = vst [vmem:[#allocation8] sm:$0xff] %v1431
    // Predicated region
    $region26: #{tpu_custom_call.1} parent=1 // pred_check
      _
    $region27: #{tpu_custom_call.1} parent=1 // pred_check_branch
      %1438 = sbr.rel (0) target = $region29
    $region28: #{tpu_custom_call.1} parent=1 // pred_region
      %s1440 = ssub.s32 128, 128
      %1441 = vsyncadd [#allocation4], %s1440
      %s1443 = sshll.u32 [#allocation8], 4
      %s1444 = int_to_ptr.vmem [resolvable:$true] %s1443
      %1446 = dma.vmem_to_hbm [thread:$0]  %s1444, 128, %s3, [#allocation4]
    $region29: #{tpu_custom_call.1} parent=1 // pred_fallthru
      _
    // Predicated region
    $region30: #{tpu_custom_call.1} parent=1 // pred_check
      _
    $region31: #{tpu_custom_call.1} parent=1 // pred_check_branch
      %1448 = sbr.rel (0) target = $region33
    $region32: #{tpu_custom_call.1} parent=1 // pred_region
      %1449 = dma.done [#allocation4], 128
    $region33: #{tpu_custom_call.1} parent=1 // pred_fallthru
      _
    %1450 = vsyncpa [#allocation3], 1
    %1451 = vsyncpa [#allocation6], 1
    %1452 = vsyncpa [#allocation4], 1

</llo_original>
